<compile_context>
chip_gen: v7x
topology: tpu7x:2x2x1
jax: 0.10.0
libtpu: 0.0.40
codegen_flags: <defaults>
</compile_context>

<pallas_src>
import jax
import jax.numpy as jnp
from jax.experimental import pallas as pl
from jax.experimental.pallas import tpu as pltpu

EPS = 1e-6       # UnitNorm epsilon (matches the PyTorch module)
BN_EPS = 1e-5    # BatchNorm1d default eps


def _elu(h):
    # ELU(alpha=1).  exp() lowers to the EUP; the negative branch is exp(h)-1.
    return jnp.where(h > 0, h, jnp.exp(h) - 1.0)


# ---------------- kernel ----------------

def _initializer_layer_kernel(x_ref, w0_ref, b0_ref,
                              w1_ref, s1_ref, t1_ref,
                              w2_ref, s2_ref, t2_ref, o_ref):
    """One fused InitializerNet layer for a batch tile.

    y = x @ W0 + b0
    h = ELU((y @ W1) * s1 + t1)      # Linear bias + eval-mode BN folded into s,t
    h = ELU((h @ W2) * s2 + t2)
    z = h + y                        # residual
    out = (z + eps) / (eps + sum(|z + eps|, axis=-1, keepdims=True))
    """
    x = x_ref[...].astype(jnp.float32)

    y = jnp.dot(x, w0_ref[...], preferred_element_type=jnp.float32,
                precision=jax.lax.Precision.HIGHEST) + b0_ref[...]

    h = jnp.dot(y, w1_ref[...], preferred_element_type=jnp.float32,
                precision=jax.lax.Precision.HIGHEST)
    h = _elu(h * s1_ref[...] + t1_ref[...])

    h = jnp.dot(h, w2_ref[...], preferred_element_type=jnp.float32,
                precision=jax.lax.Precision.HIGHEST)
    h = _elu(h * s2_ref[...] + t2_ref[...])

    z = h + y

    # UnitNorm(ord=1, dim=1): single-pass lane reduction + reciprocal-multiply.
    ze = z + EPS
    n = jnp.sum(jnp.abs(ze), axis=-1, keepdims=True)
    inv = pl.reciprocal(EPS + n, approx=False)  # exact: keeps tight tolerance
    o_ref[...] = (ze * inv).astype(o_ref.dtype)


# ---------------- wrapper ----------------

def _pick_batch_tile(batch, n_features, n_units, itemsize=4):
    """Largest sublane-aligned batch tile that divides `batch` and keeps the
    double-buffered in/out tiles within ~4 MiB (safe under the v7x 32 MiB
    scoped-VMEM default; v5e/v6e have more headroom).  Minimum sublane tile
    respects dtype packing: 8 for f32, 16 for bf16, 32 for int8/fp8."""
    min_sub = max(8, 32 // max(1, itemsize))
    budget = 4 * 1024 * 1024
    per_row = 2 * (n_features + n_units) * itemsize   # double-buffered in+out
    cap = max(min_sub, budget // max(per_row, 1))
    for tb in (4096, 2048, 1024, 512, 256, 128, 64, 32, 16, 8):
        if min_sub <= tb <= cap and batch % tb == 0:
            return tb
    return batch  # small / odd batch: whole-array block (== full dim, legal)


def initializer_net_forward(x, layer_params):
    """Pallas implementation of InitializerNet.forward.

    x: [B, n_features]; layer_params: list (length lstm_layers) of dicts with
    keys w0,b0,w1,b1,w2,b2 and BatchNorm1d parameters (inference-mode).
    Returns [lstm_layers, B, n_units].
    """
    # TODO(synk): training-mode BatchNorm1d (batch statistics) is not
    # implemented; inference-mode running stats are folded into per-feature
    # scale/shift below.
    batch, n_features = x.shape
    outs = []
    for p in layer_params:
        n_units = p["w0"].shape[1]

        # Fold (Linear bias + eval-mode BatchNorm1d) into per-feature s, t:
        #   (h + b - mean) * gamma / sqrt(var + eps) + beta  ==  h * s + t
        s1v = p["bn1_gamma"] / jnp.sqrt(p["bn1_var"] + BN_EPS)
        t1v = (p["b1"] - p["bn1_mean"]) * s1v + p["bn1_beta"]
        s2v = p["bn2_gamma"] / jnp.sqrt(p["bn2_var"] + BN_EPS)
        t2v = (p["b2"] - p["bn2_mean"]) * s2v + p["bn2_beta"]
        s1 = s1v.reshape(1, n_units).astype(jnp.float32)
        t1 = t1v.reshape(1, n_units).astype(jnp.float32)
        s2 = s2v.reshape(1, n_units).astype(jnp.float32)
        t2 = t2v.reshape(1, n_units).astype(jnp.float32)
        b0 = p["b0"].reshape(1, n_units).astype(jnp.float32)

        tb = _pick_batch_tile(batch, n_features, n_units, x.dtype.itemsize)
        grid = (batch // tb,)

        out = pl.pallas_call(
            _initializer_layer_kernel,
            out_shape=jax.ShapeDtypeStruct((batch, n_units), x.dtype),
            grid=grid,
            in_specs=[
                pl.BlockSpec((tb, n_features), lambda i: (i, 0)),       # x tile
                pl.BlockSpec((n_features, n_units), lambda i: (0, 0)),  # W0
                pl.BlockSpec((1, n_units), lambda i: (0, 0)),           # b0
                pl.BlockSpec((n_units, n_units), lambda i: (0, 0)),     # W1
                pl.BlockSpec((1, n_units), lambda i: (0, 0)),           # s1
                pl.BlockSpec((1, n_units), lambda i: (0, 0)),           # t1
                pl.BlockSpec((n_units, n_units), lambda i: (0, 0)),     # W2
                pl.BlockSpec((1, n_units), lambda i: (0, 0)),           # s2
                pl.BlockSpec((1, n_units), lambda i: (0, 0)),           # t2
            ],
            out_specs=pl.BlockSpec((tb, n_units), lambda i: (i, 0)),
            compiler_params=pltpu.CompilerParams(
                dimension_semantics=("parallel",)),
        )(x, p["w0"], b0, p["w1"], s1, t1, p["w2"], s2, t2)
        outs.append(out)
    return jnp.stack(outs, axis=0)


# ---------------- pure-JAX reference ----------------

def initializer_net_ref(x, layer_params):
    outs = []
    hp = jax.lax.Precision.HIGHEST
    for p in layer_params:
        y = jnp.dot(x, p["w0"], precision=hp) + p["b0"]
        h = jnp.dot(y, p["w1"], precision=hp) + p["b1"]
        h = (h - p["bn1_mean"]) / jnp.sqrt(p["bn1_var"] + BN_EPS) \
            * p["bn1_gamma"] + p["bn1_beta"]
        h = _elu(h)
        h = jnp.dot(h, p["w2"], precision=hp) + p["b2"]
        h = (h - p["bn2_mean"]) / jnp.sqrt(p["bn2_var"] + BN_EPS) \
            * p["bn2_gamma"] + p["bn2_beta"]
        h = _elu(h)
        z = h + y
        ze = z + EPS
        n = jnp.sum(jnp.abs(ze), axis=1, keepdims=True)
        outs.append(ze / (EPS + n))
    return jnp.stack(outs, axis=0)


if __name__ == "__main__":
    key = jax.random.PRNGKey(0)
    batch, n_features, n_units, lstm_layers = 8, 16, 128, 2

    def make_layer_params(k):
        ks = jax.random.split(k, 14)
        f32 = jnp.float32
        return {
            "w0": 0.1 * jax.random.normal(ks[0], (n_features, n_units), f32),
            "b0": 0.1 * jax.random.normal(ks[1], (n_units,), f32),
            "w1": 0.1 * jax.random.normal(ks[2], (n_units, n_units), f32),
            "b1": 0.1 * jax.random.normal(ks[3], (n_units,), f32),
            "w2": 0.1 * jax.random.normal(ks[4], (n_units, n_units), f32),
            "b2": 0.1 * jax.random.normal(ks[5], (n_units,), f32),
            # Inference-mode BatchNorm1d parameters (non-trivial to exercise
            # the scale/shift folding).
            "bn1_gamma": 1.0 + 0.1 * jax.random.normal(ks[6], (n_units,), f32),
            "bn1_beta": 0.1 * jax.random.normal(ks[7], (n_units,), f32),
            "bn1_mean": 0.1 * jax.random.normal(ks[8], (n_units,), f32),
            "bn1_var": 1.0 + 0.1 * jax.random.uniform(ks[9], (n_units,), f32),
            "bn2_gamma": 1.0 + 0.1 * jax.random.normal(ks[10], (n_units,), f32),
            "bn2_beta": 0.1 * jax.random.normal(ks[11], (n_units,), f32),
            "bn2_mean": 0.1 * jax.random.normal(ks[12], (n_units,), f32),
            "bn2_var": 1.0 + 0.1 * jax.random.uniform(ks[13], (n_units,), f32),
        }

    keys = jax.random.split(key, lstm_layers + 1)
    x = jax.random.normal(keys[0], (batch, n_features), jnp.float32)
    layer_params = [make_layer_params(keys[1 + i]) for i in range(lstm_layers)]

    out = initializer_net_forward(x, layer_params)
    out = jax.block_until_ready(out)
    ref = initializer_net_ref(x, layer_params)

    assert out.shape == (lstm_layers, batch, n_units)
    assert out.dtype == x.dtype
    max_err = float(jnp.max(jnp.abs(out - ref)))
    assert jnp.allclose(out, ref, rtol=1e-2, atol=5e-4), f"max_err={max_err}"
    print("KERNEL_OK")
</pallas_src>

<mosaic_0001>
module attributes {stable_mosaic.version = 11 : i64} {
  func.func @_initializer_layer_kernel(%arg0: i32, %arg1: memref<8x16xf32, #tpu.memory_space<vmem>>, %arg2: memref<16x128xf32, #tpu.memory_space<vmem>>, %arg3: memref<1x128xf32, #tpu.memory_space<vmem>>, %arg4: memref<128x128xf32, #tpu.memory_space<vmem>>, %arg5: memref<1x128xf32, #tpu.memory_space<vmem>>, %arg6: memref<1x128xf32, #tpu.memory_space<vmem>>, %arg7: memref<128x128xf32, #tpu.memory_space<vmem>>, %arg8: memref<1x128xf32, #tpu.memory_space<vmem>>, %arg9: memref<1x128xf32, #tpu.memory_space<vmem>>, %arg10: memref<8x128xf32, #tpu.memory_space<vmem>>) attributes {dimension_semantics = [#tpu.dimension_semantics<parallel>], iteration_bounds = array<i64: 1>, scalar_prefetch = 0 : i64, scratch_operands = 0 : i64, tpu.core_type = #tpu.core_type<tc>, window_params = [{transform_indices = @transform_0, window_bounds = array<i64: 8, 16>}, {pipeline_mode = #tpu.pipeline_mode<synchronous>, transform_indices = @transform_1, window_bounds = array<i64: 16, 128>}, {pipeline_mode = #tpu.pipeline_mode<synchronous>, transform_indices = @transform_2, window_bounds = array<i64: 1, 128>}, {pipeline_mode = #tpu.pipeline_mode<synchronous>, transform_indices = @transform_3, window_bounds = array<i64: 128, 128>}, {pipeline_mode = #tpu.pipeline_mode<synchronous>, transform_indices = @transform_4, window_bounds = array<i64: 1, 128>}, {pipeline_mode = #tpu.pipeline_mode<synchronous>, transform_indices = @transform_5, window_bounds = array<i64: 1, 128>}, {pipeline_mode = #tpu.pipeline_mode<synchronous>, transform_indices = @transform_6, window_bounds = array<i64: 128, 128>}, {pipeline_mode = #tpu.pipeline_mode<synchronous>, transform_indices = @transform_7, window_bounds = array<i64: 1, 128>}, {pipeline_mode = #tpu.pipeline_mode<synchronous>, transform_indices = @transform_8, window_bounds = array<i64: 1, 128>}, {transform_indices = @transform_9, window_bounds = array<i64: 8, 128>}]} {
    %c0 = arith.constant 0 : index
    %c0_0 = arith.constant 0 : index
    %0 = vector.load %arg1[%c0, %c0_0] : memref<8x16xf32, #tpu.memory_space<vmem>>, vector<8x16xf32>
    %c0_1 = arith.constant 0 : index
    %c0_2 = arith.constant 0 : index
    %1 = vector.load %arg2[%c0_1, %c0_2] : memref<16x128xf32, #tpu.memory_space<vmem>>, vector<16x128xf32>
    %cst = arith.constant dense<0.000000e+00> : vector<8x128xf32>
    %2 = tpu.matmul %0, %1, %cst {dimension_numbers = #tpu.dot_dimension_numbers<[1], [0], [0], [1], [0, 0, 1, 1], [], []>, precision = #tpu.contract_precision<fp32>} : vector<8x16xf32>, vector<16x128xf32>, vector<8x128xf32> -> vector<8x128xf32>
    %c0_3 = arith.constant 0 : index
    %c0_4 = arith.constant 0 : index
    %3 = vector.load %arg3[%c0_3, %c0_4] : memref<1x128xf32, #tpu.memory_space<vmem>>, vector<1x128xf32>
    %4 = vector.broadcast %3 : vector<1x128xf32> to vector<8x128xf32>
    %5 = arith.addf %2, %4 : vector<8x128xf32>
    %c0_5 = arith.constant 0 : index
    %c0_6 = arith.constant 0 : index
    %6 = vector.load %arg4[%c0_5, %c0_6] : memref<128x128xf32, #tpu.memory_space<vmem>>, vector<128x128xf32>
    %cst_7 = arith.constant dense<0.000000e+00> : vector<8x128xf32>
    %7 = tpu.matmul %5, %6, %cst_7 {dimension_numbers = #tpu.dot_dimension_numbers<[1], [0], [0], [1], [0, 0, 1, 1], [], []>, precision = #tpu.contract_precision<fp32>} : vector<8x128xf32>, vector<128x128xf32>, vector<8x128xf32> -> vector<8x128xf32>
    %c0_8 = arith.constant 0 : index
    %c0_9 = arith.constant 0 : index
    %8 = vector.load %arg5[%c0_8, %c0_9] : memref<1x128xf32, #tpu.memory_space<vmem>>, vector<1x128xf32>
    %9 = vector.broadcast %8 : vector<1x128xf32> to vector<8x128xf32>
    %10 = arith.mulf %7, %9 : vector<8x128xf32>
    %c0_10 = arith.constant 0 : index
    %c0_11 = arith.constant 0 : index
    %11 = vector.load %arg6[%c0_10, %c0_11] : memref<1x128xf32, #tpu.memory_space<vmem>>, vector<1x128xf32>
    %12 = vector.broadcast %11 : vector<1x128xf32> to vector<8x128xf32>
    %13 = arith.addf %10, %12 : vector<8x128xf32>
    %cst_12 = arith.constant 0.000000e+00 : f32
    %14 = vector.broadcast %cst_12 : f32 to vector<8x128xf32>
    %15 = arith.cmpf ogt, %13, %14 : vector<8x128xf32>
    %16 = math.exp %13 : vector<8x128xf32>
    %cst_13 = arith.constant 1.000000e+00 : f32
    %17 = vector.broadcast %cst_13 : f32 to vector<8x128xf32>
    %18 = arith.subf %16, %17 : vector<8x128xf32>
    %19 = arith.select %15, %13, %18 : vector<8x128xi1>, vector<8x128xf32>
    %c0_14 = arith.constant 0 : index
    %c0_15 = arith.constant 0 : index
    %20 = vector.load %arg7[%c0_14, %c0_15] : memref<128x128xf32, #tpu.memory_space<vmem>>, vector<128x128xf32>
    %cst_16 = arith.constant dense<0.000000e+00> : vector<8x128xf32>
    %21 = tpu.matmul %19, %20, %cst_16 {dimension_numbers = #tpu.dot_dimension_numbers<[1], [0], [0], [1], [0, 0, 1, 1], [], []>, precision = #tpu.contract_precision<fp32>} : vector<8x128xf32>, vector<128x128xf32>, vector<8x128xf32> -> vector<8x128xf32>
    %c0_17 = arith.constant 0 : index
    %c0_18 = arith.constant 0 : index
    %22 = vector.load %arg8[%c0_17, %c0_18] : memref<1x128xf32, #tpu.memory_space<vmem>>, vector<1x128xf32>
    %23 = vector.broadcast %22 : vector<1x128xf32> to vector<8x128xf32>
    %24 = arith.mulf %21, %23 : vector<8x128xf32>
    %c0_19 = arith.constant 0 : index
    %c0_20 = arith.constant 0 : index
    %25 = vector.load %arg9[%c0_19, %c0_20] : memref<1x128xf32, #tpu.memory_space<vmem>>, vector<1x128xf32>
    %26 = vector.broadcast %25 : vector<1x128xf32> to vector<8x128xf32>
    %27 = arith.addf %24, %26 : vector<8x128xf32>
    %cst_21 = arith.constant 0.000000e+00 : f32
    %28 = vector.broadcast %cst_21 : f32 to vector<8x128xf32>
    %29 = arith.cmpf ogt, %27, %28 : vector<8x128xf32>
    %30 = math.exp %27 : vector<8x128xf32>
    %cst_22 = arith.constant 1.000000e+00 : f32
    %31 = vector.broadcast %cst_22 : f32 to vector<8x128xf32>
    %32 = arith.subf %30, %31 : vector<8x128xf32>
    %33 = arith.select %29, %27, %32 : vector<8x128xi1>, vector<8x128xf32>
    %34 = arith.addf %33, %5 : vector<8x128xf32>
    %cst_23 = arith.constant 9.99999997E-7 : f32
    %35 = vector.broadcast %cst_23 : f32 to vector<8x128xf32>
    %36 = arith.addf %34, %35 : vector<8x128xf32>
    %37 = math.absf %36 : vector<8x128xf32>
    %cst_24 = arith.constant dense<0.000000e+00> : vector<8xf32>
    %38 = vector.multi_reduction <add>, %37, %cst_24 [1] : vector<8x128xf32> to vector<8xf32>
    %39 = vector.shape_cast %38 : vector<8xf32> to vector<8x1xf32>
    %cst_25 = arith.constant 9.99999997E-7 : f32
    %40 = vector.broadcast %cst_25 : f32 to vector<8x1xf32>
    %41 = arith.addf %40, %39 : vector<8x1xf32>
    %42 = tpu.reciprocal %41 : vector<8x1xf32> -> vector<8x1xf32>
    %43 = vector.broadcast %42 : vector<8x1xf32> to vector<8x128xf32>
    %44 = arith.mulf %36, %43 : vector<8x128xf32>
    %c0_26 = arith.constant 0 : index
    %c0_27 = arith.constant 0 : index
    %45 = vector.load %arg10[%c0_26, %c0_27] : memref<8x128xf32, #tpu.memory_space<vmem>>, vector<8x128xf32>
    tpu.vector_store %arg10[%c0_26, %c0_27], %44 {strides = array<i32>} : memref<8x128xf32, #tpu.memory_space<vmem>>, vector<8x128xf32>,
    return
  }
  func.func @transform_0(%arg0: i32) -> (i32, i32) {
    %c0_i32 = arith.constant 0 : i32
    %c0_i32_0 = arith.constant 0 : i32
    return %arg0, %c0_i32 : i32, i32
  }
  func.func @transform_1(%arg0: i32) -> (i32, i32) {
    %c0_i32 = arith.constant 0 : i32
    %c0_i32_0 = arith.constant 0 : i32
    %c0_i32_1 = arith.constant 0 : i32
    return %c0_i32, %c0_i32_0 : i32, i32
  }
  func.func @transform_2(%arg0: i32) -> (i32, i32) {
    %c0_i32 = arith.constant 0 : i32
    %c0_i32_0 = arith.constant 0 : i32
    %c0_i32_1 = arith.constant 0 : i32
    return %c0_i32, %c0_i32_0 : i32, i32
  }
  func.func @transform_3(%arg0: i32) -> (i32, i32) {
    %c0_i32 = arith.constant 0 : i32
    %c0_i32_0 = arith.constant 0 : i32
    %c0_i32_1 = arith.constant 0 : i32
    return %c0_i32, %c0_i32_0 : i32, i32
  }
  func.func @transform_4(%arg0: i32) -> (i32, i32) {
    %c0_i32 = arith.constant 0 : i32
    %c0_i32_0 = arith.constant 0 : i32
    %c0_i32_1 = arith.constant 0 : i32
    return %c0_i32, %c0_i32_0 : i32, i32
  }
  func.func @transform_5(%arg0: i32) -> (i32, i32) {
    %c0_i32 = arith.constant 0 : i32
    %c0_i32_0 = arith.constant 0 : i32
    %c0_i32_1 = arith.constant 0 : i32
    return %c0_i32, %c0_i32_0 : i32, i32
  }
  func.func @transform_6(%arg0: i32) -> (i32, i32) {
    %c0_i32 = arith.constant 0 : i32
    %c0_i32_0 = arith.constant 0 : i32
    %c0_i32_1 = arith.constant 0 : i32
    return %c0_i32, %c0_i32_0 : i32, i32
  }
  func.func @transform_7(%arg0: i32) -> (i32, i32) {
    %c0_i32 = arith.constant 0 : i32
    %c0_i32_0 = arith.constant 0 : i32
    %c0_i32_1 = arith.constant 0 : i32
    return %c0_i32, %c0_i32_0 : i32, i32
  }
  func.func @transform_8(%arg0: i32) -> (i32, i32) {
    %c0_i32 = arith.constant 0 : i32
    %c0_i32_0 = arith.constant 0 : i32
    %c0_i32_1 = arith.constant 0 : i32
    return %c0_i32, %c0_i32_0 : i32, i32
  }
  func.func @transform_9(%arg0: i32) -> (i32, i32) {
    %c0_i32 = arith.constant 0 : i32
    %c0_i32_0 = arith.constant 0 : i32
    return %arg0, %c0_i32 : i32, i32
  }
}

</mosaic_0001>

<llo_original>
// kernel: tpu_custom_call.1
$region0: #{tpu_custom_call.1}
  #allocation0 [shape = 'u32[]', space=smem, size = 0x4, offset = 0x4, fixed_abs, tag = 'smem constant byte address 0x4 - core index']
  #allocation1 [shape = 'u32[144,128]{1,0:T(1,128)}', space=vmem, size = 0x12000, scoped, tag = 'internal scratch']
  %s0 = inlined_call_operand.hbm [shape: f32[8,16], index: 0, kind: input, shape index: {}]
  %s1 = inlined_call_operand.hbm [shape: f32[16,128], index: 1, kind: input, shape index: {}]
  %s2 = inlined_call_operand.vmem [shape: f32[1,128], index: 2, kind: input, shape index: {}]
  %s3 = inlined_call_operand.hbm [shape: f32[128,128], index: 3, kind: input, shape index: {}]
  %s4 = inlined_call_operand.vmem [shape: f32[1,128], index: 4, kind: input, shape index: {}]
  %s5 = inlined_call_operand.vmem [shape: f32[1,128], index: 5, kind: input, shape index: {}]
  %s6 = inlined_call_operand.hbm [shape: f32[128,128], index: 6, kind: input, shape index: {}]
  %s7 = inlined_call_operand.vmem [shape: f32[1,128], index: 7, kind: input, shape index: {}]
  %s8 = inlined_call_operand.vmem [shape: f32[1,128], index: 8, kind: input, shape index: {}]
  %s9 = inlined_call_operand.hbm [shape: f32[8,128], index: 9, kind: output, shape index: {}]
  %s10 = sld [smem:[#allocation0]]
  $region62: #{tpu_custom_call.1} parent=0
    _
  %s12 = ssub.s32 1, %s10
  %s13 = scalar_select 0, %s12, %s10
  $region1: #{tpu_custom_call.1} parent=0
    #allocation2 [shape = 'u8[4096]{0}', space=vmem, size = 0x1000, scoped, tag = 'input window, operand 0, single buffered']
    #allocation3 [shape = 's32[1]{0}', space=sflag, size = 0x4, scoped, tag = 'scoped memory for tpu_custom_call.1']
    #allocation4 [shape = 's32[1]{0}', space=sflag, size = 0x4, scoped, tag = 'scoped memory for tpu_custom_call.1']
    #allocation5 [shape = 'u8[8192]{0}', space=vmem, size = 0x2000, scoped, tag = 'input window, operand 1, single buffered']
    #allocation6 [shape = 's32[1]{0}', space=sflag, size = 0x4, scoped, tag = 'scoped memory for tpu_custom_call.1']
    #allocation7 [shape = 'u8[65536]{0}', space=vmem, size = 0x10000, scoped, tag = 'input window, operand 3, single buffered']
    #allocation8 [shape = 'u8[65536]{0}', space=vmem, size = 0x10000, scoped, tag = 'input window, operand 6, single buffered']
    #allocation9 [shape = 's32[1]{0}', space=sflag, size = 0x4, scoped, tag = 'scoped memory for tpu_custom_call.1']
    #allocation10 [shape = 'u8[4096]{0}', space=vmem, size = 0x1000, scoped, tag = 'output window, operand 0, single buffered']
    %14 = vsyncpa [#allocation3], 0
    %15 = vsyncpa [#allocation6], 0
    %16 = vsyncpa [#allocation9], 0
    %17 = vsyncpa [#allocation4], 0
    // Predicated region
    $region2: #{tpu_custom_call.1} parent=1 // pred_check
      _
    $region3: #{tpu_custom_call.1} parent=1 // pred_check_branch
      %19 = sbr.rel (0) target = $region5
    $region4: #{tpu_custom_call.1} parent=1 // pred_region
      %s21 = ssub.s32 128, 128
      %22 = vsyncadd [#allocation3], %s21
      %s24 = sshll.u32 [#allocation2], 4
      %s25 = int_to_ptr.vmem [resolvable:$true] %s24
      %27 = dma.hbm_to_vmem [thread:$0]  %s0, 128, %s25, [#allocation3]
    $region5: #{tpu_custom_call.1} parent=1 // pred_fallthru
      _
    // Predicated region
    $region6: #{tpu_custom_call.1} parent=1 // pred_check
      _
    $region7: #{tpu_custom_call.1} parent=1 // pred_check_branch
      %29 = sbr.rel (0) target = $region9
    $region8: #{tpu_custom_call.1} parent=1 // pred_region
      %s31 = ssub.s32 256, 256
      %32 = vsyncadd [#allocation6], %s31
      %s33 = sshll.u32 [#allocation5], 4
      %s34 = int_to_ptr.vmem [resolvable:$true] %s33
      %39 = dma.hbm_to_vmem [thread:$0]  %s1, 256, %s34, [#allocation6], 128, 128, 8
    $region9: #{tpu_custom_call.1} parent=1 // pred_fallthru
      _
    // Predicated region
    $region10: #{tpu_custom_call.1} parent=1 // pred_check
      _
    $region11: #{tpu_custom_call.1} parent=1 // pred_check_branch
      %41 = sbr.rel (0) target = $region13
    $region12: #{tpu_custom_call.1} parent=1 // pred_region
      _
    $region13: #{tpu_custom_call.1} parent=1 // pred_fallthru
      _
    // Predicated region
    $region14: #{tpu_custom_call.1} parent=1 // pred_check
      _
    $region15: #{tpu_custom_call.1} parent=1 // pred_check_branch
      %43 = sbr.rel (0) target = $region17
    $region16: #{tpu_custom_call.1} parent=1 // pred_region
      %s45 = ssub.s32 2048, 2048
      %46 = vsyncadd [#allocation6], %s45
      %s47 = sshll.u32 [#allocation7], 4
      %s48 = int_to_ptr.vmem [resolvable:$true] %s47
      %53 = dma.hbm_to_vmem [thread:$0]  %s3, 2048, %s48, [#allocation6], 128, 128, 8
    $region17: #{tpu_custom_call.1} parent=1 // pred_fallthru
      _
    // Predicated region
    $region18: #{tpu_custom_call.1} parent=1 // pred_check
      _
    $region19: #{tpu_custom_call.1} parent=1 // pred_check_branch
      %55 = sbr.rel (0) target = $region21
    $region20: #{tpu_custom_call.1} parent=1 // pred_region
      _
    $region21: #{tpu_custom_call.1} parent=1 // pred_fallthru
      _
    // Predicated region
    $region22: #{tpu_custom_call.1} parent=1 // pred_check
      _
    $region23: #{tpu_custom_call.1} parent=1 // pred_check_branch
      %57 = sbr.rel (0) target = $region25
    $region24: #{tpu_custom_call.1} parent=1 // pred_region
      _
    $region25: #{tpu_custom_call.1} parent=1 // pred_fallthru
      _
    // Predicated region
    $region26: #{tpu_custom_call.1} parent=1 // pred_check
      _
    $region27: #{tpu_custom_call.1} parent=1 // pred_check_branch
      %59 = sbr.rel (0) target = $region29
    $region28: #{tpu_custom_call.1} parent=1 // pred_region
      %s61 = ssub.s32 2048, 2048
      %62 = vsyncadd [#allocation9], %s61
      %s63 = sshll.u32 [#allocation8], 4
      %s64 = int_to_ptr.vmem [resolvable:$true] %s63
      %69 = dma.hbm_to_vmem [thread:$0]  %s6, 2048, %s64, [#allocation9], 128, 128, 8
    $region29: #{tpu_custom_call.1} parent=1 // pred_fallthru
      _
    // Predicated region
    $region30: #{tpu_custom_call.1} parent=1 // pred_check
      _
    $region31: #{tpu_custom_call.1} parent=1 // pred_check_branch
      %71 = sbr.rel (0) target = $region33
    $region32: #{tpu_custom_call.1} parent=1 // pred_region
      _
    $region33: #{tpu_custom_call.1} parent=1 // pred_fallthru
      _
    // Predicated region
    $region34: #{tpu_custom_call.1} parent=1 // pred_check
      _
    $region35: #{tpu_custom_call.1} parent=1 // pred_check_branch
      %73 = sbr.rel (0) target = $region37
    $region36: #{tpu_custom_call.1} parent=1 // pred_region
      _
    $region37: #{tpu_custom_call.1} parent=1 // pred_fallthru
      _
    // Predicated region
    $region38: #{tpu_custom_call.1} parent=1 // pred_check
      _
    $region39: #{tpu_custom_call.1} parent=1 // pred_check_branch
      %75 = sbr.rel (0) target = $region41
    $region40: #{tpu_custom_call.1} parent=1 // pred_region
      %76 = dma.done [#allocation3], 128
    $region41: #{tpu_custom_call.1} parent=1 // pred_fallthru
      _
    // Predicated region
    $region42: #{tpu_custom_call.1} parent=1 // pred_check
      _
    $region43: #{tpu_custom_call.1} parent=1 // pred_check_branch
      %78 = sbr.rel (0) target = $region45
    $region44: #{tpu_custom_call.1} parent=1 // pred_region
      %79 = dma.done [#allocation6], 256
    $region45: #{tpu_custom_call.1} parent=1 // pred_fallthru
      _
    // Predicated region
    $region46: #{tpu_custom_call.1} parent=1 // pred_check
      _
    $region47: #{tpu_custom_call.1} parent=1 // pred_check_branch
      %81 = sbr.rel (0) target = $region49
    $region48: #{tpu_custom_call.1} parent=1 // pred_region
      %82 = dma.done [#allocation6], 2048
    $region49: #{tpu_custom_call.1} parent=1 // pred_fallthru
      _
    // Predicated region
    $region50: #{tpu_custom_call.1} parent=1 // pred_check
      _
    $region51: #{tpu_custom_call.1} parent=1 // pred_check_branch
      %84 = sbr.rel (0) target = $region53
    $region52: #{tpu_custom_call.1} parent=1 // pred_region
      %85 = dma.done [#allocation9], 2048
    $region53: #{tpu_custom_call.1} parent=1 // pred_fallthru
      _
    %v86 = vld [vmem:[#allocation2] sm:$0xff]
    %v87 = vld [vmem:[#allocation5] sm:$0xff]
    %v88 = vld [vmem:[#allocation5 + $0x8] sm:$0xff]
    %v89 = vld [vmem:[%s2] sm:$0x1]
    %v91 = vlaneseq
    %v92 = vshrl.u32 %v91, 7
    %v93 = vsub.s32 0, %v92
    %v94 = vrot.slane %v89, %v93
    %vm96 = vcmask 130048
    %v98 = vsel %vm96, %v86, 0
    %100 = vmatprep.subr.mxu0 0.0
    %v101 = vand.u32 %v87, 4294901760
    %102 = vmatpush1.msra.mxu0 %v101
    %103 = vmatprep.subr.mxu0 0.0
    %v104 = vand.u32 %v88, 4294901760
    %105 = vmatpush1.msra.mxu0 %v104
    %106 = vmatprep.subr.mxu0 0.0
    %107 = vmatpush1.msra.mxu0 0.0
    %108 = vmatprep.subr.mxu0 0.0
    %109 = vmatpush1.msra.mxu0 0.0
    %110 = vmatprep.subr.mxu0 0.0
    %111 = vmatpush1.msra.mxu0 0.0
    %112 = vmatprep.subr.mxu0 0.0
    %113 = vmatpush1.msra.mxu0 0.0
    %114 = vmatprep.subr.mxu0 0.0
    %115 = vmatpush1.msra.mxu0 0.0
    %116 = vmatprep.subr.mxu0 0.0
    %117 = vmatpush1.msra.mxu0 0.0
    %118 = vmatprep.subr.mxu0 0.0
    %119 = vmatpush1.msra.mxu0 0.0
    %120 = vmatprep.subr.mxu0 0.0
    %121 = vmatpush1.msra.mxu0 0.0
    %122 = vmatprep.subr.mxu0 0.0
    %123 = vmatpush1.msra.mxu0 0.0
    %124 = vmatprep.subr.mxu0 0.0
    %125 = vmatpush1.msra.mxu0 0.0
    %126 = vmatprep.subr.mxu0 0.0
    %127 = vmatpush1.msra.mxu0 0.0
    %128 = vmatprep.subr.mxu0 0.0
    %129 = vmatpush1.msra.mxu0 0.0
    %130 = vmatprep.subr.mxu0 0.0
    %131 = vmatpush1.msra.mxu0 0.0
    %132 = vmatprep.subr.mxu0 0.0
    %133 = vmatpush1.msra.mxu0 0.0
    %134 = vmatprep.subr.mxu0 0.0
    %135 = vmatpush1.msra.mxu0 0.0
    %136 = vmatprep.subr.mxu0 0.0
    %137 = vmatpush1.msra.mxu0 0.0
    %138 = vmatprep.subr.mxu0 0.0
    %139 = vmatpush1.msra.mxu0 0.0
    %140 = vmatprep.subr.mxu0 0.0
    %141 = vmatpush1.msra.mxu0 0.0
    %142 = vmatprep.subr.mxu0 0.0
    %143 = vmatpush1.msra.mxu0 0.0
    %144 = vmatprep.subr.mxu0 0.0
    %145 = vmatpush1.msra.mxu0 0.0
    %146 = vmatprep.subr.mxu0 0.0
    %147 = vmatpush1.msra.mxu0 0.0
    %148 = vmatprep.subr.mxu0 0.0
    %149 = vmatpush1.msra.mxu0 0.0
    %150 = vmatprep.subr.mxu0 0.0
    %151 = vmatpush1.msra.mxu0 0.0
    %152 = vmatprep.subr.mxu0 0.0
    %153 = vmatpush1.msra.mxu0 0.0
    %154 = vmatprep.subr.mxu0 0.0
    %155 = vmatpush1.msra.mxu0 0.0
    %156 = vmatprep.subr.mxu0 0.0
    %157 = vmatpush1.msra.mxu0 0.0
    %158 = vmatprep.subr.mxu0 0.0
    %159 = vmatpush1.msra.mxu0 0.0
    %160 = vmatprep.subr.mxu0 0.0
    %161 = vmatpush1.msra.mxu0 0.0
    %162 = vmatprep.subr.mxu0 0.0
    %163 = vmatpush1.msra.mxu0 0.0
    %164 = vmatprep.subr.mxu0 0.0
    %165 = vmatpush1.msra.mxu0 0.0
    %166 = vmatprep.mubr.f32.mxu0 0.0
    %v167 = vand.u32 %v98, 4294901760
    %v168 = vsub.f32 %v98, %v167
    %v169 = vand.u32 %v168, 4294901760
    %v170 = vsub.f32 %v168, %v169
    %v171 = vand.u32 %v170, 4294901760
    %172 = vmatmul.mubr.f32.gmra.mrb[0].mxu0 %v171
    %v173 = vpop.f32.mrb[0].mxu0
    %v174 = vadd.f32 %v94, %v173
    %v175 = vpop.f32.mrb[0].mxu0
    %176 = vdwg.mxu0
    %177 = vmatprep.subr.mxu0 0.0
    %v178 = vand.u32 %v87, 4294901760
    %v179 = vsub.f32 %v87, %v178
    %v180 = vand.u32 %v179, 4294901760
    %v181 = vsub.f32 %v179, %v180
    %v182 = vand.u32 %v181, 4294901760
    %183 = vmatpush1.msra.mxu0 %v182
    %184 = vmatprep.subr.mxu0 0.0
    %v185 = vand.u32 %v88, 4294901760
    %v186 = vsub.f32 %v88, %v185
    %v187 = vand.u32 %v186, 4294901760
    %v188 = vsub.f32 %v186, %v187
    %v189 = vand.u32 %v188, 4294901760
    %190 = vmatpush1.msra.mxu0 %v189
    %191 = vmatprep.subr.mxu0 0.0
    %192 = vmatpush1.msra.mxu0 0.0
    %193 = vmatprep.subr.mxu0 0.0
    %194 = vmatpush1.msra.mxu0 0.0
    %195 = vmatprep.subr.mxu0 0.0
    %196 = vmatpush1.msra.mxu0 0.0
    %197 = vmatprep.subr.mxu0 0.0
    %198 = vmatpush1.msra.mxu0 0.0
    %199 = vmatprep.subr.mxu0 0.0
    %200 = vmatpush1.msra.mxu0 0.0
    %201 = vmatprep.subr.mxu0 0.0
    %202 = vmatpush1.msra.mxu0 0.0
    %203 = vmatprep.subr.mxu0 0.0
    %204 = vmatpush1.msra.mxu0 0.0
    %205 = vmatprep.subr.mxu0 0.0
    %206 = vmatpush1.msra.mxu0 0.0
    %207 = vmatprep.subr.mxu0 0.0
    %208 = vmatpush1.msra.mxu0 0.0
    %209 = vmatprep.subr.mxu0 0.0
    %210 = vmatpush1.msra.mxu0 0.0
    %211 = vmatprep.subr.mxu0 0.0
    %212 = vmatpush1.msra.mxu0 0.0
    %213 = vmatprep.subr.mxu0 0.0
    %214 = vmatpush1.msra.mxu0 0.0
    %215 = vmatprep.subr.mxu0 0.0
    %216 = vmatpush1.msra.mxu0 0.0
    %217 = vmatprep.subr.mxu0 0.0
    %218 = vmatpush1.msra.mxu0 0.0
    %219 = vmatprep.subr.mxu0 0.0
    %220 = vmatpush1.msra.mxu0 0.0
    %221 = vmatprep.subr.mxu0 0.0
    %222 = vmatpush1.msra.mxu0 0.0
    %223 = vmatprep.subr.mxu0 0.0
    %224 = vmatpush1.msra.mxu0 0.0
    %225 = vmatprep.subr.mxu0 0.0
    %226 = vmatpush1.msra.mxu0 0.0
    %227 = vmatprep.subr.mxu0 0.0
    %228 = vmatpush1.msra.mxu0 0.0
    %229 = vmatprep.subr.mxu0 0.0
    %230 = vmatpush1.msra.mxu0 0.0
    %231 = vmatprep.subr.mxu0 0.0
    %232 = vmatpush1.msra.mxu0 0.0
    %233 = vmatprep.subr.mxu0 0.0
    %234 = vmatpush1.msra.mxu0 0.0
    %235 = vmatprep.subr.mxu0 0.0
    %236 = vmatpush1.msra.mxu0 0.0
    %237 = vmatprep.subr.mxu0 0.0
    %238 = vmatpush1.msra.mxu0 0.0
    %239 = vmatprep.subr.mxu0 0.0
    %240 = vmatpush1.msra.mxu0 0.0
    %241 = vmatprep.subr.mxu0 0.0
    %242 = vmatpush1.msra.mxu0 0.0
    %243 = vmatprep.subr.mxu0 0.0
    %244 = vmatpush1.msra.mxu0 0.0
    %245 = vmatprep.subr.mxu0 0.0
    %246 = vmatpush1.msra.mxu0 0.0
    %247 = vmatprep.subr.mxu0 0.0
    %248 = vmatpush1.msra.mxu0 0.0
    %249 = vmatprep.subr.mxu0 0.0
    %250 = vmatpush1.msra.mxu0 0.0
    %251 = vmatprep.mubr.f32.mxu0 0.0
    %v252 = vand.u32 %v98, 4294901760
    %253 = vmatmul.mubr.f32.gmra.mrb[0].mxu0 %v252
    %v254 = vpop.f32.mrb[0].mxu0
    %v255 = vadd.f32 %v174, %v254
    %v256 = vpop.f32.mrb[0].mxu0
    %257 = vdwg.mxu0
    %258 = vmatprep.subr.mxu0 0.0
    %v259 = vand.u32 %v87, 4294901760
    %v260 = vsub.f32 %v87, %v259
    %261 = vmatpush1.msra.mxu0 %v260
    %262 = vmatprep.subr.mxu0 0.0
    %v263 = vand.u32 %v88, 4294901760
    %v264 = vsub.f32 %v88, %v263
    %265 = vmatpush1.msra.mxu0 %v264
    %266 = vmatprep.subr.mxu0 0.0
    %267 = vmatpush1.msra.mxu0 0.0
    %268 = vmatprep.subr.mxu0 0.0
    %269 = vmatpush1.msra.mxu0 0.0
    %270 = vmatprep.subr.mxu0 0.0
    %271 = vmatpush1.msra.mxu0 0.0
    %272 = vmatprep.subr.mxu0 0.0
    %273 = vmatpush1.msra.mxu0 0.0
    %274 = vmatprep.subr.mxu0 0.0
    %275 = vmatpush1.msra.mxu0 0.0
    %276 = vmatprep.subr.mxu0 0.0
    %277 = vmatpush1.msra.mxu0 0.0
    %278 = vmatprep.subr.mxu0 0.0
    %279 = vmatpush1.msra.mxu0 0.0
    %280 = vmatprep.subr.mxu0 0.0
    %281 = vmatpush1.msra.mxu0 0.0
    %282 = vmatprep.subr.mxu0 0.0
    %283 = vmatpush1.msra.mxu0 0.0
    %284 = vmatprep.subr.mxu0 0.0
    %285 = vmatpush1.msra.mxu0 0.0
    %286 = vmatprep.subr.mxu0 0.0
    %287 = vmatpush1.msra.mxu0 0.0
    %288 = vmatprep.subr.mxu0 0.0
    %289 = vmatpush1.msra.mxu0 0.0
    %290 = vmatprep.subr.mxu0 0.0
    %291 = vmatpush1.msra.mxu0 0.0
    %292 = vmatprep.subr.mxu0 0.0
    %293 = vmatpush1.msra.mxu0 0.0
    %294 = vmatprep.subr.mxu0 0.0
    %295 = vmatpush1.msra.mxu0 0.0
    %296 = vmatprep.subr.mxu0 0.0
    %297 = vmatpush1.msra.mxu0 0.0
    %298 = vmatprep.subr.mxu0 0.0
    %299 = vmatpush1.msra.mxu0 0.0
    %300 = vmatprep.subr.mxu0 0.0
    %301 = vmatpush1.msra.mxu0 0.0
    %302 = vmatprep.subr.mxu0 0.0
    %303 = vmatpush1.msra.mxu0 0.0
    %304 = vmatprep.subr.mxu0 0.0
    %305 = vmatpush1.msra.mxu0 0.0
    %306 = vmatprep.subr.mxu0 0.0
    %307 = vmatpush1.msra.mxu0 0.0
    %308 = vmatprep.subr.mxu0 0.0
    %309 = vmatpush1.msra.mxu0 0.0
    %310 = vmatprep.subr.mxu0 0.0
    %311 = vmatpush1.msra.mxu0 0.0
    %312 = vmatprep.subr.mxu0 0.0
    %313 = vmatpush1.msra.mxu0 0.0
    %314 = vmatprep.subr.mxu0 0.0
    %315 = vmatpush1.msra.mxu0 0.0
    %316 = vmatprep.subr.mxu0 0.0
    %317 = vmatpush1.msra.mxu0 0.0
    %318 = vmatprep.subr.mxu0 0.0
    %319 = vmatpush1.msra.mxu0 0.0
    %320 = vmatprep.subr.mxu0 0.0
    %321 = vmatpush1.msra.mxu0 0.0
    %322 = vmatprep.subr.mxu0 0.0
    %323 = vmatpush1.msra.mxu0 0.0
    %324 = vmatprep.subr.mxu0 0.0
    %325 = vmatpush1.msra.mxu0 0.0
    %326 = vmatprep.mubr.f32.mxu0 0.0
    %v327 = vand.u32 %v98, 4294901760
    %v328 = vsub.f32 %v98, %v327
    %329 = vmatmul.mubr.f32.gmra.mrb[0].mxu0 %v328
    %v330 = vpop.f32.mrb[0].mxu0
    %v331 = vadd.f32 %v255, %v330
    %v332 = vpop.f32.mrb[0].mxu0
    %333 = vdwg.mxu0
    %334 = vmatprep.subr.mxu0 0.0
    %v335 = vand.u32 %v87, 4294901760
    %336 = vmatpush1.msra.mxu0 %v335
    %337 = vmatprep.subr.mxu0 0.0
    %v338 = vand.u32 %v88, 4294901760
    %339 = vmatpush1.msra.mxu0 %v338
    %340 = vmatprep.subr.mxu0 0.0
    %341 = vmatpush1.msra.mxu0 0.0
    %342 = vmatprep.subr.mxu0 0.0
    %343 = vmatpush1.msra.mxu0 0.0
    %344 = vmatprep.subr.mxu0 0.0
    %345 = vmatpush1.msra.mxu0 0.0
    %346 = vmatprep.subr.mxu0 0.0
    %347 = vmatpush1.msra.mxu0 0.0
    %348 = vmatprep.subr.mxu0 0.0
    %349 = vmatpush1.msra.mxu0 0.0
    %350 = vmatprep.subr.mxu0 0.0
    %351 = vmatpush1.msra.mxu0 0.0
    %352 = vmatprep.subr.mxu0 0.0
    %353 = vmatpush1.msra.mxu0 0.0
    %354 = vmatprep.subr.mxu0 0.0
    %355 = vmatpush1.msra.mxu0 0.0
    %356 = vmatprep.subr.mxu0 0.0
    %357 = vmatpush1.msra.mxu0 0.0
    %358 = vmatprep.subr.mxu0 0.0
    %359 = vmatpush1.msra.mxu0 0.0
    %360 = vmatprep.subr.mxu0 0.0
    %361 = vmatpush1.msra.mxu0 0.0
    %362 = vmatprep.subr.mxu0 0.0
    %363 = vmatpush1.msra.mxu0 0.0
    %364 = vmatprep.subr.mxu0 0.0
    %365 = vmatpush1.msra.mxu0 0.0
    %366 = vmatprep.subr.mxu0 0.0
    %367 = vmatpush1.msra.mxu0 0.0
    %368 = vmatprep.subr.mxu0 0.0
    %369 = vmatpush1.msra.mxu0 0.0
    %370 = vmatprep.subr.mxu0 0.0
    %371 = vmatpush1.msra.mxu0 0.0
    %372 = vmatprep.subr.mxu0 0.0
    %373 = vmatpush1.msra.mxu0 0.0
    %374 = vmatprep.subr.mxu0 0.0
    %375 = vmatpush1.msra.mxu0 0.0
    %376 = vmatprep.subr.mxu0 0.0
    %377 = vmatpush1.msra.mxu0 0.0
    %378 = vmatprep.subr.mxu0 0.0
    %379 = vmatpush1.msra.mxu0 0.0
    %380 = vmatprep.subr.mxu0 0.0
    %381 = vmatpush1.msra.mxu0 0.0
    %382 = vmatprep.subr.mxu0 0.0
    %383 = vmatpush1.msra.mxu0 0.0
    %384 = vmatprep.subr.mxu0 0.0
    %385 = vmatpush1.msra.mxu0 0.0
    %386 = vmatprep.subr.mxu0 0.0
    %387 = vmatpush1.msra.mxu0 0.0
    %388 = vmatprep.subr.mxu0 0.0
    %389 = vmatpush1.msra.mxu0 0.0
    %390 = vmatprep.subr.mxu0 0.0
    %391 = vmatpush1.msra.mxu0 0.0
    %392 = vmatprep.subr.mxu0 0.0
    %393 = vmatpush1.msra.mxu0 0.0
    %394 = vmatprep.subr.mxu0 0.0
    %395 = vmatpush1.msra.mxu0 0.0
    %396 = vmatprep.subr.mxu0 0.0
    %397 = vmatpush1.msra.mxu0 0.0
    %398 = vmatprep.subr.mxu0 0.0
    %399 = vmatpush1.msra.mxu0 0.0
    %400 = vmatprep.mubr.f32.mxu0 0.0
    %v401 = vand.u32 %v98, 4294901760
    %v402 = vsub.f32 %v98, %v401
    %v403 = vand.u32 %v402, 4294901760
    %404 = vmatmul.mubr.f32.gmra.mrb[0].mxu0 %v403
    %v405 = vpop.f32.mrb[0].mxu0
    %v406 = vadd.f32 %v331, %v405
    %v407 = vpop.f32.mrb[0].mxu0
    %408 = vdwg.mxu0
    %409 = vmatprep.subr.mxu0 0.0
    %v410 = vand.u32 %v87, 4294901760
    %v411 = vsub.f32 %v87, %v410
    %v412 = vand.u32 %v411, 4294901760
    %413 = vmatpush1.msra.mxu0 %v412
    %414 = vmatprep.subr.mxu0 0.0
    %v415 = vand.u32 %v88, 4294901760
    %v416 = vsub.f32 %v88, %v415
    %v417 = vand.u32 %v416, 4294901760
    %418 = vmatpush1.msra.mxu0 %v417
    %419 = vmatprep.subr.mxu0 0.0
    %420 = vmatpush1.msra.mxu0 0.0
    %421 = vmatprep.subr.mxu0 0.0
    %422 = vmatpush1.msra.mxu0 0.0
    %423 = vmatprep.subr.mxu0 0.0
    %424 = vmatpush1.msra.mxu0 0.0
    %425 = vmatprep.subr.mxu0 0.0
    %426 = vmatpush1.msra.mxu0 0.0
    %427 = vmatprep.subr.mxu0 0.0
    %428 = vmatpush1.msra.mxu0 0.0
    %429 = vmatprep.subr.mxu0 0.0
    %430 = vmatpush1.msra.mxu0 0.0
    %431 = vmatprep.subr.mxu0 0.0
    %432 = vmatpush1.msra.mxu0 0.0
    %433 = vmatprep.subr.mxu0 0.0
    %434 = vmatpush1.msra.mxu0 0.0
    %435 = vmatprep.subr.mxu0 0.0
    %436 = vmatpush1.msra.mxu0 0.0
    %437 = vmatprep.subr.mxu0 0.0
    %438 = vmatpush1.msra.mxu0 0.0
    %439 = vmatprep.subr.mxu0 0.0
    %440 = vmatpush1.msra.mxu0 0.0
    %441 = vmatprep.subr.mxu0 0.0
    %442 = vmatpush1.msra.mxu0 0.0
    %443 = vmatprep.subr.mxu0 0.0
    %444 = vmatpush1.msra.mxu0 0.0
    %445 = vmatprep.subr.mxu0 0.0
    %446 = vmatpush1.msra.mxu0 0.0
    %447 = vmatprep.subr.mxu0 0.0
    %448 = vmatpush1.msra.mxu0 0.0
    %449 = vmatprep.subr.mxu0 0.0
    %450 = vmatpush1.msra.mxu0 0.0
    %451 = vmatprep.subr.mxu0 0.0
    %452 = vmatpush1.msra.mxu0 0.0
    %453 = vmatprep.subr.mxu0 0.0
    %454 = vmatpush1.msra.mxu0 0.0
    %455 = vmatprep.subr.mxu0 0.0
    %456 = vmatpush1.msra.mxu0 0.0
    %457 = vmatprep.subr.mxu0 0.0
    %458 = vmatpush1.msra.mxu0 0.0
    %459 = vmatprep.subr.mxu0 0.0
    %460 = vmatpush1.msra.mxu0 0.0
    %461 = vmatprep.subr.mxu0 0.0
    %462 = vmatpush1.msra.mxu0 0.0
    %463 = vmatprep.subr.mxu0 0.0
    %464 = vmatpush1.msra.mxu0 0.0
    %465 = vmatprep.subr.mxu0 0.0
    %466 = vmatpush1.msra.mxu0 0.0
    %467 = vmatprep.subr.mxu0 0.0
    %468 = vmatpush1.msra.mxu0 0.0
    %469 = vmatprep.subr.mxu0 0.0
    %470 = vmatpush1.msra.mxu0 0.0
    %471 = vmatprep.subr.mxu0 0.0
    %472 = vmatpush1.msra.mxu0 0.0
    %473 = vmatprep.subr.mxu0 0.0
    %474 = vmatpush1.msra.mxu0 0.0
    %475 = vmatprep.subr.mxu0 0.0
    %476 = vmatpush1.msra.mxu0 0.0
    %477 = vmatprep.subr.mxu0 0.0
    %478 = vmatpush1.msra.mxu0 0.0
    %479 = vmatprep.mubr.f32.mxu0 0.0
    %v480 = vand.u32 %v98, 4294901760
    %481 = vmatmul.mubr.f32.gmra.mrb[0].mxu0 %v480
    %v482 = vpop.f32.mrb[0].mxu0
    %v483 = vadd.f32 %v406, %v482
    %v484 = vpop.f32.mrb[0].mxu0
    %485 = vdwg.mxu0
    %486 = vmatprep.subr.mxu0 0.0
    %v487 = vand.u32 %v87, 4294901760
    %488 = vmatpush1.msra.mxu0 %v487
    %489 = vmatprep.subr.mxu0 0.0
    %v490 = vand.u32 %v88, 4294901760
    %491 = vmatpush1.msra.mxu0 %v490
    %492 = vmatprep.subr.mxu0 0.0
    %493 = vmatpush1.msra.mxu0 0.0
    %494 = vmatprep.subr.mxu0 0.0
    %495 = vmatpush1.msra.mxu0 0.0
    %496 = vmatprep.subr.mxu0 0.0
    %497 = vmatpush1.msra.mxu0 0.0
    %498 = vmatprep.subr.mxu0 0.0
    %499 = vmatpush1.msra.mxu0 0.0
    %500 = vmatprep.subr.mxu0 0.0
    %501 = vmatpush1.msra.mxu0 0.0
    %502 = vmatprep.subr.mxu0 0.0
    %503 = vmatpush1.msra.mxu0 0.0
    %504 = vmatprep.subr.mxu0 0.0
    %505 = vmatpush1.msra.mxu0 0.0
    %506 = vmatprep.subr.mxu0 0.0
    %507 = vmatpush1.msra.mxu0 0.0
    %508 = vmatprep.subr.mxu0 0.0
    %509 = vmatpush1.msra.mxu0 0.0
    %510 = vmatprep.subr.mxu0 0.0
    %511 = vmatpush1.msra.mxu0 0.0
    %512 = vmatprep.subr.mxu0 0.0
    %513 = vmatpush1.msra.mxu0 0.0
    %514 = vmatprep.subr.mxu0 0.0
    %515 = vmatpush1.msra.mxu0 0.0
    %516 = vmatprep.subr.mxu0 0.0
    %517 = vmatpush1.msra.mxu0 0.0
    %518 = vmatprep.subr.mxu0 0.0
    %519 = vmatpush1.msra.mxu0 0.0
    %520 = vmatprep.subr.mxu0 0.0
    %521 = vmatpush1.msra.mxu0 0.0
    %522 = vmatprep.subr.mxu0 0.0
    %523 = vmatpush1.msra.mxu0 0.0
    %524 = vmatprep.subr.mxu0 0.0
    %525 = vmatpush1.msra.mxu0 0.0
    %526 = vmatprep.subr.mxu0 0.0
    %527 = vmatpush1.msra.mxu0 0.0
    %528 = vmatprep.subr.mxu0 0.0
    %529 = vmatpush1.msra.mxu0 0.0
    %530 = vmatprep.subr.mxu0 0.0
    %531 = vmatpush1.msra.mxu0 0.0
    %532 = vmatprep.subr.mxu0 0.0
    %533 = vmatpush1.msra.mxu0 0.0
    %534 = vmatprep.subr.mxu0 0.0
    %535 = vmatpush1.msra.mxu0 0.0
    %536 = vmatprep.subr.mxu0 0.0
    %537 = vmatpush1.msra.mxu0 0.0
    %538 = vmatprep.subr.mxu0 0.0
    %539 = vmatpush1.msra.mxu0 0.0
    %540 = vmatprep.subr.mxu0 0.0
    %541 = vmatpush1.msra.mxu0 0.0
    %542 = vmatprep.subr.mxu0 0.0
    %543 = vmatpush1.msra.mxu0 0.0
    %544 = vmatprep.subr.mxu0 0.0
    %545 = vmatpush1.msra.mxu0 0.0
    %546 = vmatprep.subr.mxu0 0.0
    %547 = vmatpush1.msra.mxu0 0.0
    %548 = vmatprep.subr.mxu0 0.0
    %549 = vmatpush1.msra.mxu0 0.0
    %550 = vmatprep.subr.mxu0 0.0
    %551 = vmatpush1.msra.mxu0 0.0
    %552 = vmatprep.mubr.f32.mxu0 0.0
    %v553 = vand.u32 %v98, 4294901760
    %554 = vmatmul.mubr.f32.gmra.mrb[0].mxu0 %v553
    %v555 = vpop.f32.mrb[0].mxu0
    %v556 = vadd.f32 %v483, %v555
    %v557 = vpop.f32.mrb[0].mxu0
    %558 = vdwg.mxu0
    %v559 = vld [vmem:[#allocation7] sm:$0xff]
    %v560 = vld [vmem:[#allocation7 + $0x8] sm:$0xff]
    %v561 = vld [vmem:[#allocation7 + $0x10] sm:$0xff]
    %v562 = vld [vmem:[#allocation7 + $0x18] sm:$0xff]
    %v563 = vld [vmem:[#allocation7 + $0x20] sm:$0xff]
    %v564 = vld [vmem:[#allocation7 + $0x28] sm:$0xff]
    %v565 = vld [vmem:[#allocation7 + $0x30] sm:$0xff]
    %v566 = vld [vmem:[#allocation7 + $0x38] sm:$0xff]
    %v567 = vld [vmem:[#allocation7 + $0x40] sm:$0xff]
    %v568 = vld [vmem:[#allocation7 + $0x48] sm:$0xff]
    %v569 = vld [vmem:[#allocation7 + $0x50] sm:$0xff]
    %v570 = vld [vmem:[#allocation7 + $0x58] sm:$0xff]
    %v571 = vld [vmem:[#allocation7 + $0x60] sm:$0xff]
    %v572 = vld [vmem:[#allocation7 + $0x68] sm:$0xff]
    %v573 = vld [vmem:[#allocation7 + $0x70] sm:$0xff]
    %v574 = vld [vmem:[#allocation7 + $0x78] sm:$0xff]
    %575 = vmatprep.subr.mxu0 0.0
    %v576 = vand.u32 %v559, 4294901760
    %577 = vmatpush1.msra.mxu0 %v576
    %578 = vmatprep.subr.mxu0 0.0
    %v579 = vand.u32 %v560, 4294901760
    %580 = vmatpush1.msra.mxu0 %v579
    %581 = vmatprep.subr.mxu0 0.0
    %v582 = vand.u32 %v561, 4294901760
    %583 = vmatpush1.msra.mxu0 %v582
    %584 = vmatprep.subr.mxu0 0.0
    %v585 = vand.u32 %v562, 4294901760
    %586 = vmatpush1.msra.mxu0 %v585
    %587 = vmatprep.subr.mxu0 0.0
    %v588 = vand.u32 %v563, 4294901760
    %589 = vmatpush1.msra.mxu0 %v588
    %590 = vmatprep.subr.mxu0 0.0
    %v591 = vand.u32 %v564, 4294901760
    %592 = vmatpush1.msra.mxu0 %v591
    %593 = vmatprep.subr.mxu0 0.0
    %v594 = vand.u32 %v565, 4294901760
    %595 = vmatpush1.msra.mxu0 %v594
    %596 = vmatprep.subr.mxu0 0.0
    %v597 = vand.u32 %v566, 4294901760
    %598 = vmatpush1.msra.mxu0 %v597
    %599 = vmatprep.subr.mxu0 0.0
    %v600 = vand.u32 %v567, 4294901760
    %601 = vmatpush1.msra.mxu0 %v600
    %602 = vmatprep.subr.mxu0 0.0
    %v603 = vand.u32 %v568, 4294901760
    %604 = vmatpush1.msra.mxu0 %v603
    %605 = vmatprep.subr.mxu0 0.0
    %v606 = vand.u32 %v569, 4294901760
    %607 = vmatpush1.msra.mxu0 %v606
    %608 = vmatprep.subr.mxu0 0.0
    %v609 = vand.u32 %v570, 4294901760
    %610 = vmatpush1.msra.mxu0 %v609
    %611 = vmatprep.subr.mxu0 0.0
    %v612 = vand.u32 %v571, 4294901760
    %613 = vmatpush1.msra.mxu0 %v612
    %614 = vmatprep.subr.mxu0 0.0
    %v615 = vand.u32 %v572, 4294901760
    %616 = vmatpush1.msra.mxu0 %v615
    %617 = vmatprep.subr.mxu0 0.0
    %v618 = vand.u32 %v573, 4294901760
    %619 = vmatpush1.msra.mxu0 %v618
    %620 = vmatprep.subr.mxu0 0.0
    %v621 = vand.u32 %v574, 4294901760
    %622 = vmatpush1.msra.mxu0 %v621
    %623 = vmatprep.subr.mxu0 0.0
    %624 = vmatpush1.msra.mxu0 0.0
    %625 = vmatprep.subr.mxu0 0.0
    %626 = vmatpush1.msra.mxu0 0.0
    %627 = vmatprep.subr.mxu0 0.0
    %628 = vmatpush1.msra.mxu0 0.0
    %629 = vmatprep.subr.mxu0 0.0
    %630 = vmatpush1.msra.mxu0 0.0
    %631 = vmatprep.subr.mxu0 0.0
    %632 = vmatpush1.msra.mxu0 0.0
    %633 = vmatprep.subr.mxu0 0.0
    %634 = vmatpush1.msra.mxu0 0.0
    %635 = vmatprep.subr.mxu0 0.0
    %636 = vmatpush1.msra.mxu0 0.0
    %637 = vmatprep.subr.mxu0 0.0
    %638 = vmatpush1.msra.mxu0 0.0
    %639 = vmatprep.subr.mxu0 0.0
    %640 = vmatpush1.msra.mxu0 0.0
    %641 = vmatprep.subr.mxu0 0.0
    %642 = vmatpush1.msra.mxu0 0.0
    %643 = vmatprep.subr.mxu0 0.0
    %644 = vmatpush1.msra.mxu0 0.0
    %645 = vmatprep.subr.mxu0 0.0
    %646 = vmatpush1.msra.mxu0 0.0
    %647 = vmatprep.subr.mxu0 0.0
    %648 = vmatpush1.msra.mxu0 0.0
    %649 = vmatprep.subr.mxu0 0.0
    %650 = vmatpush1.msra.mxu0 0.0
    %651 = vmatprep.subr.mxu0 0.0
    %652 = vmatpush1.msra.mxu0 0.0
    %653 = vmatprep.subr.mxu0 0.0
    %654 = vmatpush1.msra.mxu0 0.0
    %655 = vmatprep.mubr.f32.mxu0 0.0
    %v656 = vand.u32 %v556, 4294901760
    %v657 = vsub.f32 %v556, %v656
    %v658 = vand.u32 %v657, 4294901760
    %v659 = vsub.f32 %v657, %v658
    %v660 = vand.u32 %v659, 4294901760
    %661 = vmatmul.mubr.f32.gmra.mrb[0].mxu0 %v660
    %v662 = vpop.f32.mrb[0].mxu0
    %v663 = vadd.f32 0.0, %v662
    %v664 = vpop.f32.mrb[0].mxu0
    %665 = vdwg.mxu0
    %666 = vmatprep.subr.mxu0 0.0
    %v667 = vand.u32 %v559, 4294901760
    %v668 = vsub.f32 %v559, %v667
    %v669 = vand.u32 %v668, 4294901760
    %v670 = vsub.f32 %v668, %v669
    %v671 = vand.u32 %v670, 4294901760
    %672 = vmatpush1.msra.mxu0 %v671
    %673 = vmatprep.subr.mxu0 0.0
    %v674 = vand.u32 %v560, 4294901760
    %v675 = vsub.f32 %v560, %v674
    %v676 = vand.u32 %v675, 4294901760
    %v677 = vsub.f32 %v675, %v676
    %v678 = vand.u32 %v677, 4294901760
    %679 = vmatpush1.msra.mxu0 %v678
    %680 = vmatprep.subr.mxu0 0.0
    %v681 = vand.u32 %v561, 4294901760
    %v682 = vsub.f32 %v561, %v681
    %v683 = vand.u32 %v682, 4294901760
    %v684 = vsub.f32 %v682, %v683
    %v685 = vand.u32 %v684, 4294901760
    %686 = vmatpush1.msra.mxu0 %v685
    %687 = vmatprep.subr.mxu0 0.0
    %v688 = vand.u32 %v562, 4294901760
    %v689 = vsub.f32 %v562, %v688
    %v690 = vand.u32 %v689, 4294901760
    %v691 = vsub.f32 %v689, %v690
    %v692 = vand.u32 %v691, 4294901760
    %693 = vmatpush1.msra.mxu0 %v692
    %694 = vmatprep.subr.mxu0 0.0
    %v695 = vand.u32 %v563, 4294901760
    %v696 = vsub.f32 %v563, %v695
    %v697 = vand.u32 %v696, 4294901760
    %v698 = vsub.f32 %v696, %v697
    %v699 = vand.u32 %v698, 4294901760
    %700 = vmatpush1.msra.mxu0 %v699
    %701 = vmatprep.subr.mxu0 0.0
    %v702 = vand.u32 %v564, 4294901760
    %v703 = vsub.f32 %v564, %v702
    %v704 = vand.u32 %v703, 4294901760
    %v705 = vsub.f32 %v703, %v704
    %v706 = vand.u32 %v705, 4294901760
    %707 = vmatpush1.msra.mxu0 %v706
    %708 = vmatprep.subr.mxu0 0.0
    %v709 = vand.u32 %v565, 4294901760
    %v710 = vsub.f32 %v565, %v709
    %v711 = vand.u32 %v710, 4294901760
    %v712 = vsub.f32 %v710, %v711
    %v713 = vand.u32 %v712, 4294901760
    %714 = vmatpush1.msra.mxu0 %v713
    %715 = vmatprep.subr.mxu0 0.0
    %v716 = vand.u32 %v566, 4294901760
    %v717 = vsub.f32 %v566, %v716
    %v718 = vand.u32 %v717, 4294901760
    %v719 = vsub.f32 %v717, %v718
    %v720 = vand.u32 %v719, 4294901760
    %721 = vmatpush1.msra.mxu0 %v720
    %722 = vmatprep.subr.mxu0 0.0
    %v723 = vand.u32 %v567, 4294901760
    %v724 = vsub.f32 %v567, %v723
    %v725 = vand.u32 %v724, 4294901760
    %v726 = vsub.f32 %v724, %v725
    %v727 = vand.u32 %v726, 4294901760
    %728 = vmatpush1.msra.mxu0 %v727
    %729 = vmatprep.subr.mxu0 0.0
    %v730 = vand.u32 %v568, 4294901760
    %v731 = vsub.f32 %v568, %v730
    %v732 = vand.u32 %v731, 4294901760
    %v733 = vsub.f32 %v731, %v732
    %v734 = vand.u32 %v733, 4294901760
    %735 = vmatpush1.msra.mxu0 %v734
    %736 = vmatprep.subr.mxu0 0.0
    %v737 = vand.u32 %v569, 4294901760
    %v738 = vsub.f32 %v569, %v737
    %v739 = vand.u32 %v738, 4294901760
    %v740 = vsub.f32 %v738, %v739
    %v741 = vand.u32 %v740, 4294901760
    %742 = vmatpush1.msra.mxu0 %v741
    %743 = vmatprep.subr.mxu0 0.0
    %v744 = vand.u32 %v570, 4294901760
    %v745 = vsub.f32 %v570, %v744
    %v746 = vand.u32 %v745, 4294901760
    %v747 = vsub.f32 %v745, %v746
    %v748 = vand.u32 %v747, 4294901760
    %749 = vmatpush1.msra.mxu0 %v748
    %750 = vmatprep.subr.mxu0 0.0
    %v751 = vand.u32 %v571, 4294901760
    %v752 = vsub.f32 %v571, %v751
    %v753 = vand.u32 %v752, 4294901760
    %v754 = vsub.f32 %v752, %v753
    %v755 = vand.u32 %v754, 4294901760
    %756 = vmatpush1.msra.mxu0 %v755
    %757 = vmatprep.subr.mxu0 0.0
    %v758 = vand.u32 %v572, 4294901760
    %v759 = vsub.f32 %v572, %v758
    %v760 = vand.u32 %v759, 4294901760
    %v761 = vsub.f32 %v759, %v760
    %v762 = vand.u32 %v761, 4294901760
    %763 = vmatpush1.msra.mxu0 %v762
    %764 = vmatprep.subr.mxu0 0.0
    %v765 = vand.u32 %v573, 4294901760
    %v766 = vsub.f32 %v573, %v765
    %v767 = vand.u32 %v766, 4294901760
    %v768 = vsub.f32 %v766, %v767
    %v769 = vand.u32 %v768, 4294901760
    %770 = vmatpush1.msra.mxu0 %v769
    %771 = vmatprep.subr.mxu0 0.0
    %v772 = vand.u32 %v574, 4294901760
    %v773 = vsub.f32 %v574, %v772
    %v774 = vand.u32 %v773, 4294901760
    %v775 = vsub.f32 %v773, %v774
    %v776 = vand.u32 %v775, 4294901760
    %777 = vmatpush1.msra.mxu0 %v776
    %778 = vmatprep.subr.mxu0 0.0
    %779 = vmatpush1.msra.mxu0 0.0
    %780 = vmatprep.subr.mxu0 0.0
    %781 = vmatpush1.msra.mxu0 0.0
    %782 = vmatprep.subr.mxu0 0.0
    %783 = vmatpush1.msra.mxu0 0.0
    %784 = vmatprep.subr.mxu0 0.0
    %785 = vmatpush1.msra.mxu0 0.0
    %786 = vmatprep.subr.mxu0 0.0
    %787 = vmatpush1.msra.mxu0 0.0
    %788 = vmatprep.subr.mxu0 0.0
    %789 = vmatpush1.msra.mxu0 0.0
    %790 = vmatprep.subr.mxu0 0.0
    %791 = vmatpush1.msra.mxu0 0.0
    %792 = vmatprep.subr.mxu0 0.0
    %793 = vmatpush1.msra.mxu0 0.0
    %794 = vmatprep.subr.mxu0 0.0
    %795 = vmatpush1.msra.mxu0 0.0
    %796 = vmatprep.subr.mxu0 0.0
    %797 = vmatpush1.msra.mxu0 0.0
    %798 = vmatprep.subr.mxu0 0.0
    %799 = vmatpush1.msra.mxu0 0.0
    %800 = vmatprep.subr.mxu0 0.0
    %801 = vmatpush1.msra.mxu0 0.0
    %802 = vmatprep.subr.mxu0 0.0
    %803 = vmatpush1.msra.mxu0 0.0
    %804 = vmatprep.subr.mxu0 0.0
    %805 = vmatpush1.msra.mxu0 0.0
    %806 = vmatprep.subr.mxu0 0.0
    %807 = vmatpush1.msra.mxu0 0.0
    %808 = vmatprep.subr.mxu0 0.0
    %809 = vmatpush1.msra.mxu0 0.0
    %810 = vmatprep.mubr.f32.mxu0 0.0
    %v811 = vand.u32 %v556, 4294901760
    %812 = vmatmul.mubr.f32.gmra.mrb[0].mxu0 %v811
    %v813 = vpop.f32.mrb[0].mxu0
    %v814 = vadd.f32 %v663, %v813
    %v815 = vpop.f32.mrb[0].mxu0
    %816 = vdwg.mxu0
    %817 = vmatprep.subr.mxu0 0.0
    %v818 = vand.u32 %v559, 4294901760
    %v819 = vsub.f32 %v559, %v818
    %820 = vmatpush1.msra.mxu0 %v819
    %821 = vmatprep.subr.mxu0 0.0
    %v822 = vand.u32 %v560, 4294901760
    %v823 = vsub.f32 %v560, %v822
    %824 = vmatpush1.msra.mxu0 %v823
    %825 = vmatprep.subr.mxu0 0.0
    %v826 = vand.u32 %v561, 4294901760
    %v827 = vsub.f32 %v561, %v826
    %828 = vmatpush1.msra.mxu0 %v827
    %829 = vmatprep.subr.mxu0 0.0
    %v830 = vand.u32 %v562, 4294901760
    %v831 = vsub.f32 %v562, %v830
    %832 = vmatpush1.msra.mxu0 %v831
    %833 = vmatprep.subr.mxu0 0.0
    %v834 = vand.u32 %v563, 4294901760
    %v835 = vsub.f32 %v563, %v834
    %836 = vmatpush1.msra.mxu0 %v835
    %837 = vmatprep.subr.mxu0 0.0
    %v838 = vand.u32 %v564, 4294901760
    %v839 = vsub.f32 %v564, %v838
    %840 = vmatpush1.msra.mxu0 %v839
    %841 = vmatprep.subr.mxu0 0.0
    %v842 = vand.u32 %v565, 4294901760
    %v843 = vsub.f32 %v565, %v842
    %844 = vmatpush1.msra.mxu0 %v843
    %845 = vmatprep.subr.mxu0 0.0
    %v846 = vand.u32 %v566, 4294901760
    %v847 = vsub.f32 %v566, %v846
    %848 = vmatpush1.msra.mxu0 %v847
    %849 = vmatprep.subr.mxu0 0.0
    %v850 = vand.u32 %v567, 4294901760
    %v851 = vsub.f32 %v567, %v850
    %852 = vmatpush1.msra.mxu0 %v851
    %853 = vmatprep.subr.mxu0 0.0
    %v854 = vand.u32 %v568, 4294901760
    %v855 = vsub.f32 %v568, %v854
    %856 = vmatpush1.msra.mxu0 %v855
    %857 = vmatprep.subr.mxu0 0.0
    %v858 = vand.u32 %v569, 4294901760
    %v859 = vsub.f32 %v569, %v858
    %860 = vmatpush1.msra.mxu0 %v859
    %861 = vmatprep.subr.mxu0 0.0
    %v862 = vand.u32 %v570, 4294901760
    %v863 = vsub.f32 %v570, %v862
    %864 = vmatpush1.msra.mxu0 %v863
    %865 = vmatprep.subr.mxu0 0.0
    %v866 = vand.u32 %v571, 4294901760
    %v867 = vsub.f32 %v571, %v866
    %868 = vmatpush1.msra.mxu0 %v867
    %869 = vmatprep.subr.mxu0 0.0
    %v870 = vand.u32 %v572, 4294901760
    %v871 = vsub.f32 %v572, %v870
    %872 = vmatpush1.msra.mxu0 %v871
    %873 = vmatprep.subr.mxu0 0.0
    %v874 = vand.u32 %v573, 4294901760
    %v875 = vsub.f32 %v573, %v874
    %876 = vmatpush1.msra.mxu0 %v875
    %877 = vmatprep.subr.mxu0 0.0
    %v878 = vand.u32 %v574, 4294901760
    %v879 = vsub.f32 %v574, %v878
    %880 = vmatpush1.msra.mxu0 %v879
    %881 = vmatprep.subr.mxu0 0.0
    %882 = vmatpush1.msra.mxu0 0.0
    %883 = vmatprep.subr.mxu0 0.0
    %884 = vmatpush1.msra.mxu0 0.0
    %885 = vmatprep.subr.mxu0 0.0
    %886 = vmatpush1.msra.mxu0 0.0
    %887 = vmatprep.subr.mxu0 0.0
    %888 = vmatpush1.msra.mxu0 0.0
    %889 = vmatprep.subr.mxu0 0.0
    %890 = vmatpush1.msra.mxu0 0.0
    %891 = vmatprep.subr.mxu0 0.0
    %892 = vmatpush1.msra.mxu0 0.0
    %893 = vmatprep.subr.mxu0 0.0
    %894 = vmatpush1.msra.mxu0 0.0
    %895 = vmatprep.subr.mxu0 0.0
    %896 = vmatpush1.msra.mxu0 0.0
    %897 = vmatprep.subr.mxu0 0.0
    %898 = vmatpush1.msra.mxu0 0.0
    %899 = vmatprep.subr.mxu0 0.0
    %900 = vmatpush1.msra.mxu0 0.0
    %901 = vmatprep.subr.mxu0 0.0
    %902 = vmatpush1.msra.mxu0 0.0
    %903 = vmatprep.subr.mxu0 0.0
    %904 = vmatpush1.msra.mxu0 0.0
    %905 = vmatprep.subr.mxu0 0.0
    %906 = vmatpush1.msra.mxu0 0.0
    %907 = vmatprep.subr.mxu0 0.0
    %908 = vmatpush1.msra.mxu0 0.0
    %909 = vmatprep.subr.mxu0 0.0
    %910 = vmatpush1.msra.mxu0 0.0
    %911 = vmatprep.subr.mxu0 0.0
    %912 = vmatpush1.msra.mxu0 0.0
    %913 = vmatprep.mubr.f32.mxu0 0.0
    %v914 = vand.u32 %v556, 4294901760
    %v915 = vsub.f32 %v556, %v914
    %916 = vmatmul.mubr.f32.gmra.mrb[0].mxu0 %v915
    %v917 = vpop.f32.mrb[0].mxu0
    %v918 = vadd.f32 %v814, %v917
    %v919 = vpop.f32.mrb[0].mxu0
    %920 = vdwg.mxu0
    %921 = vmatprep.subr.mxu0 0.0
    %v922 = vand.u32 %v559, 4294901760
    %923 = vmatpush1.msra.mxu0 %v922
    %924 = vmatprep.subr.mxu0 0.0
    %v925 = vand.u32 %v560, 4294901760
    %926 = vmatpush1.msra.mxu0 %v925
    %927 = vmatprep.subr.mxu0 0.0
    %v928 = vand.u32 %v561, 4294901760
    %929 = vmatpush1.msra.mxu0 %v928
    %930 = vmatprep.subr.mxu0 0.0
    %v931 = vand.u32 %v562, 4294901760
    %932 = vmatpush1.msra.mxu0 %v931
    %933 = vmatprep.subr.mxu0 0.0
    %v934 = vand.u32 %v563, 4294901760
    %935 = vmatpush1.msra.mxu0 %v934
    %936 = vmatprep.subr.mxu0 0.0
    %v937 = vand.u32 %v564, 4294901760
    %938 = vmatpush1.msra.mxu0 %v937
    %939 = vmatprep.subr.mxu0 0.0
    %v940 = vand.u32 %v565, 4294901760
    %941 = vmatpush1.msra.mxu0 %v940
    %942 = vmatprep.subr.mxu0 0.0
    %v943 = vand.u32 %v566, 4294901760
    %944 = vmatpush1.msra.mxu0 %v943
    %945 = vmatprep.subr.mxu0 0.0
    %v946 = vand.u32 %v567, 4294901760
    %947 = vmatpush1.msra.mxu0 %v946
    %948 = vmatprep.subr.mxu0 0.0
    %v949 = vand.u32 %v568, 4294901760
    %950 = vmatpush1.msra.mxu0 %v949
    %951 = vmatprep.subr.mxu0 0.0
    %v952 = vand.u32 %v569, 4294901760
    %953 = vmatpush1.msra.mxu0 %v952
    %954 = vmatprep.subr.mxu0 0.0
    %v955 = vand.u32 %v570, 4294901760
    %956 = vmatpush1.msra.mxu0 %v955
    %957 = vmatprep.subr.mxu0 0.0
    %v958 = vand.u32 %v571, 4294901760
    %959 = vmatpush1.msra.mxu0 %v958
    %960 = vmatprep.subr.mxu0 0.0
    %v961 = vand.u32 %v572, 4294901760
    %962 = vmatpush1.msra.mxu0 %v961
    %963 = vmatprep.subr.mxu0 0.0
    %v964 = vand.u32 %v573, 4294901760
    %965 = vmatpush1.msra.mxu0 %v964
    %966 = vmatprep.subr.mxu0 0.0
    %v967 = vand.u32 %v574, 4294901760
    %968 = vmatpush1.msra.mxu0 %v967
    %969 = vmatprep.subr.mxu0 0.0
    %970 = vmatpush1.msra.mxu0 0.0
    %971 = vmatprep.subr.mxu0 0.0
    %972 = vmatpush1.msra.mxu0 0.0
    %973 = vmatprep.subr.mxu0 0.0
    %974 = vmatpush1.msra.mxu0 0.0
    %975 = vmatprep.subr.mxu0 0.0
    %976 = vmatpush1.msra.mxu0 0.0
    %977 = vmatprep.subr.mxu0 0.0
    %978 = vmatpush1.msra.mxu0 0.0
    %979 = vmatprep.subr.mxu0 0.0
    %980 = vmatpush1.msra.mxu0 0.0
    %981 = vmatprep.subr.mxu0 0.0
    %982 = vmatpush1.msra.mxu0 0.0
    %983 = vmatprep.subr.mxu0 0.0
    %984 = vmatpush1.msra.mxu0 0.0
    %985 = vmatprep.subr.mxu0 0.0
    %986 = vmatpush1.msra.mxu0 0.0
    %987 = vmatprep.subr.mxu0 0.0
    %988 = vmatpush1.msra.mxu0 0.0
    %989 = vmatprep.subr.mxu0 0.0
    %990 = vmatpush1.msra.mxu0 0.0
    %991 = vmatprep.subr.mxu0 0.0
    %992 = vmatpush1.msra.mxu0 0.0
    %993 = vmatprep.subr.mxu0 0.0
    %994 = vmatpush1.msra.mxu0 0.0
    %995 = vmatprep.subr.mxu0 0.0
    %996 = vmatpush1.msra.mxu0 0.0
    %997 = vmatprep.subr.mxu0 0.0
    %998 = vmatpush1.msra.mxu0 0.0
    %999 = vmatprep.subr.mxu0 0.0
    %1000 = vmatpush1.msra.mxu0 0.0
    %1001 = vmatprep.mubr.f32.mxu0 0.0
    %v1002 = vand.u32 %v556, 4294901760
    %v1003 = vsub.f32 %v556, %v1002
    %v1004 = vand.u32 %v1003, 4294901760
    %1005 = vmatmul.mubr.f32.gmra.mrb[0].mxu0 %v1004
    %v1006 = vpop.f32.mrb[0].mxu0
    %v1007 = vadd.f32 %v918, %v1006
    %v1008 = vpop.f32.mrb[0].mxu0
    %1009 = vdwg.mxu0
    %1010 = vmatprep.subr.mxu0 0.0
    %v1011 = vand.u32 %v559, 4294901760
    %v1012 = vsub.f32 %v559, %v1011
    %v1013 = vand.u32 %v1012, 4294901760
    %1014 = vmatpush1.msra.mxu0 %v1013
    %1015 = vmatprep.subr.mxu0 0.0
    %v1016 = vand.u32 %v560, 4294901760
    %v1017 = vsub.f32 %v560, %v1016
    %v1018 = vand.u32 %v1017, 4294901760
    %1019 = vmatpush1.msra.mxu0 %v1018
    %1020 = vmatprep.subr.mxu0 0.0
    %v1021 = vand.u32 %v561, 4294901760
    %v1022 = vsub.f32 %v561, %v1021
    %v1023 = vand.u32 %v1022, 4294901760
    %1024 = vmatpush1.msra.mxu0 %v1023
    %1025 = vmatprep.subr.mxu0 0.0
    %v1026 = vand.u32 %v562, 4294901760
    %v1027 = vsub.f32 %v562, %v1026
    %v1028 = vand.u32 %v1027, 4294901760
    %1029 = vmatpush1.msra.mxu0 %v1028
    %1030 = vmatprep.subr.mxu0 0.0
    %v1031 = vand.u32 %v563, 4294901760
    %v1032 = vsub.f32 %v563, %v1031
    %v1033 = vand.u32 %v1032, 4294901760
    %1034 = vmatpush1.msra.mxu0 %v1033
    %1035 = vmatprep.subr.mxu0 0.0
    %v1036 = vand.u32 %v564, 4294901760
    %v1037 = vsub.f32 %v564, %v1036
    %v1038 = vand.u32 %v1037, 4294901760
    %1039 = vmatpush1.msra.mxu0 %v1038
    %1040 = vmatprep.subr.mxu0 0.0
    %v1041 = vand.u32 %v565, 4294901760
    %v1042 = vsub.f32 %v565, %v1041
    %v1043 = vand.u32 %v1042, 4294901760
    %1044 = vmatpush1.msra.mxu0 %v1043
    %1045 = vmatprep.subr.mxu0 0.0
    %v1046 = vand.u32 %v566, 4294901760
    %v1047 = vsub.f32 %v566, %v1046
    %v1048 = vand.u32 %v1047, 4294901760
    %1049 = vmatpush1.msra.mxu0 %v1048
    %1050 = vmatprep.subr.mxu0 0.0
    %v1051 = vand.u32 %v567, 4294901760
    %v1052 = vsub.f32 %v567, %v1051
    %v1053 = vand.u32 %v1052, 4294901760
    %1054 = vmatpush1.msra.mxu0 %v1053
    %1055 = vmatprep.subr.mxu0 0.0
    %v1056 = vand.u32 %v568, 4294901760
    %v1057 = vsub.f32 %v568, %v1056
    %v1058 = vand.u32 %v1057, 4294901760
    %1059 = vmatpush1.msra.mxu0 %v1058
    %1060 = vmatprep.subr.mxu0 0.0
    %v1061 = vand.u32 %v569, 4294901760
    %v1062 = vsub.f32 %v569, %v1061
    %v1063 = vand.u32 %v1062, 4294901760
    %1064 = vmatpush1.msra.mxu0 %v1063
    %1065 = vmatprep.subr.mxu0 0.0
    %v1066 = vand.u32 %v570, 4294901760
    %v1067 = vsub.f32 %v570, %v1066
    %v1068 = vand.u32 %v1067, 4294901760
    %1069 = vmatpush1.msra.mxu0 %v1068
    %1070 = vmatprep.subr.mxu0 0.0
    %v1071 = vand.u32 %v571, 4294901760
    %v1072 = vsub.f32 %v571, %v1071
    %v1073 = vand.u32 %v1072, 4294901760
    %1074 = vmatpush1.msra.mxu0 %v1073
    %1075 = vmatprep.subr.mxu0 0.0
    %v1076 = vand.u32 %v572, 4294901760
    %v1077 = vsub.f32 %v572, %v1076
    %v1078 = vand.u32 %v1077, 4294901760
    %1079 = vmatpush1.msra.mxu0 %v1078
    %1080 = vmatprep.subr.mxu0 0.0
    %v1081 = vand.u32 %v573, 4294901760
    %v1082 = vsub.f32 %v573, %v1081
    %v1083 = vand.u32 %v1082, 4294901760
    %1084 = vmatpush1.msra.mxu0 %v1083
    %1085 = vmatprep.subr.mxu0 0.0
    %v1086 = vand.u32 %v574, 4294901760
    %v1087 = vsub.f32 %v574, %v1086
    %v1088 = vand.u32 %v1087, 4294901760
    %1089 = vmatpush1.msra.mxu0 %v1088
    %1090 = vmatprep.subr.mxu0 0.0
    %1091 = vmatpush1.msra.mxu0 0.0
    %1092 = vmatprep.subr.mxu0 0.0
    %1093 = vmatpush1.msra.mxu0 0.0
    %1094 = vmatprep.subr.mxu0 0.0
    %1095 = vmatpush1.msra.mxu0 0.0
    %1096 = vmatprep.subr.mxu0 0.0
    %1097 = vmatpush1.msra.mxu0 0.0
    %1098 = vmatprep.subr.mxu0 0.0
    %1099 = vmatpush1.msra.mxu0 0.0
    %1100 = vmatprep.subr.mxu0 0.0
    %1101 = vmatpush1.msra.mxu0 0.0
    %1102 = vmatprep.subr.mxu0 0.0
    %1103 = vmatpush1.msra.mxu0 0.0
    %1104 = vmatprep.subr.mxu0 0.0
    %1105 = vmatpush1.msra.mxu0 0.0
    %1106 = vmatprep.subr.mxu0 0.0
    %1107 = vmatpush1.msra.mxu0 0.0
    %1108 = vmatprep.subr.mxu0 0.0
    %1109 = vmatpush1.msra.mxu0 0.0
    %1110 = vmatprep.subr.mxu0 0.0
    %1111 = vmatpush1.msra.mxu0 0.0
    %1112 = vmatprep.subr.mxu0 0.0
    %1113 = vmatpush1.msra.mxu0 0.0
    %1114 = vmatprep.subr.mxu0 0.0
    %1115 = vmatpush1.msra.mxu0 0.0
    %1116 = vmatprep.subr.mxu0 0.0
    %1117 = vmatpush1.msra.mxu0 0.0
    %1118 = vmatprep.subr.mxu0 0.0
    %1119 = vmatpush1.msra.mxu0 0.0
    %1120 = vmatprep.subr.mxu0 0.0
    %1121 = vmatpush1.msra.mxu0 0.0
    %1122 = vmatprep.mubr.f32.mxu0 0.0
    %v1123 = vand.u32 %v556, 4294901760
    %1124 = vmatmul.mubr.f32.gmra.mrb[0].mxu0 %v1123
    %v1125 = vpop.f32.mrb[0].mxu0
    %v1126 = vadd.f32 %v1007, %v1125
    %v1127 = vpop.f32.mrb[0].mxu0
    %1128 = vdwg.mxu0
    %1129 = vmatprep.subr.mxu0 0.0
    %v1130 = vand.u32 %v559, 4294901760
    %1131 = vmatpush1.msra.mxu0 %v1130
    %1132 = vmatprep.subr.mxu0 0.0
    %v1133 = vand.u32 %v560, 4294901760
    %1134 = vmatpush1.msra.mxu0 %v1133
    %1135 = vmatprep.subr.mxu0 0.0
    %v1136 = vand.u32 %v561, 4294901760
    %1137 = vmatpush1.msra.mxu0 %v1136
    %1138 = vmatprep.subr.mxu0 0.0
    %v1139 = vand.u32 %v562, 4294901760
    %1140 = vmatpush1.msra.mxu0 %v1139
    %1141 = vmatprep.subr.mxu0 0.0
    %v1142 = vand.u32 %v563, 4294901760
    %1143 = vmatpush1.msra.mxu0 %v1142
    %1144 = vmatprep.subr.mxu0 0.0
    %v1145 = vand.u32 %v564, 4294901760
    %1146 = vmatpush1.msra.mxu0 %v1145
    %1147 = vmatprep.subr.mxu0 0.0
    %v1148 = vand.u32 %v565, 4294901760
    %1149 = vmatpush1.msra.mxu0 %v1148
    %1150 = vmatprep.subr.mxu0 0.0
    %v1151 = vand.u32 %v566, 4294901760
    %1152 = vmatpush1.msra.mxu0 %v1151
    %1153 = vmatprep.subr.mxu0 0.0
    %v1154 = vand.u32 %v567, 4294901760
    %1155 = vmatpush1.msra.mxu0 %v1154
    %1156 = vmatprep.subr.mxu0 0.0
    %v1157 = vand.u32 %v568, 4294901760
    %1158 = vmatpush1.msra.mxu0 %v1157
    %1159 = vmatprep.subr.mxu0 0.0
    %v1160 = vand.u32 %v569, 4294901760
    %1161 = vmatpush1.msra.mxu0 %v1160
    %1162 = vmatprep.subr.mxu0 0.0
    %v1163 = vand.u32 %v570, 4294901760
    %1164 = vmatpush1.msra.mxu0 %v1163
    %1165 = vmatprep.subr.mxu0 0.0
    %v1166 = vand.u32 %v571, 4294901760
    %1167 = vmatpush1.msra.mxu0 %v1166
    %1168 = vmatprep.subr.mxu0 0.0
    %v1169 = vand.u32 %v572, 4294901760
    %1170 = vmatpush1.msra.mxu0 %v1169
    %1171 = vmatprep.subr.mxu0 0.0
    %v1172 = vand.u32 %v573, 4294901760
    %1173 = vmatpush1.msra.mxu0 %v1172
    %1174 = vmatprep.subr.mxu0 0.0
    %v1175 = vand.u32 %v574, 4294901760
    %1176 = vmatpush1.msra.mxu0 %v1175
    %1177 = vmatprep.subr.mxu0 0.0
    %1178 = vmatpush1.msra.mxu0 0.0
    %1179 = vmatprep.subr.mxu0 0.0
    %1180 = vmatpush1.msra.mxu0 0.0
    %1181 = vmatprep.subr.mxu0 0.0
    %1182 = vmatpush1.msra.mxu0 0.0
    %1183 = vmatprep.subr.mxu0 0.0
    %1184 = vmatpush1.msra.mxu0 0.0
    %1185 = vmatprep.subr.mxu0 0.0
    %1186 = vmatpush1.msra.mxu0 0.0
    %1187 = vmatprep.subr.mxu0 0.0
    %1188 = vmatpush1.msra.mxu0 0.0
    %1189 = vmatprep.subr.mxu0 0.0
    %1190 = vmatpush1.msra.mxu0 0.0
    %1191 = vmatprep.subr.mxu0 0.0
    %1192 = vmatpush1.msra.mxu0 0.0
    %1193 = vmatprep.subr.mxu0 0.0
    %1194 = vmatpush1.msra.mxu0 0.0
    %1195 = vmatprep.subr.mxu0 0.0
    %1196 = vmatpush1.msra.mxu0 0.0
    %1197 = vmatprep.subr.mxu0 0.0
    %1198 = vmatpush1.msra.mxu0 0.0
    %1199 = vmatprep.subr.mxu0 0.0
    %1200 = vmatpush1.msra.mxu0 0.0
    %1201 = vmatprep.subr.mxu0 0.0
    %1202 = vmatpush1.msra.mxu0 0.0
    %1203 = vmatprep.subr.mxu0 0.0
    %1204 = vmatpush1.msra.mxu0 0.0
    %1205 = vmatprep.subr.mxu0 0.0
    %1206 = vmatpush1.msra.mxu0 0.0
    %1207 = vmatprep.subr.mxu0 0.0
    %1208 = vmatpush1.msra.mxu0 0.0
    %1209 = vmatprep.mubr.f32.mxu0 0.0
    %v1210 = vand.u32 %v556, 4294901760
    %1211 = vmatmul.mubr.f32.gmra.mrb[0].mxu0 %v1210
    %v1212 = vpop.f32.mrb[0].mxu0
    %v1213 = vadd.f32 %v1126, %v1212
    %v1214 = vpop.f32.mrb[0].mxu0
    %1215 = vdwg.mxu0
    %v1216 = vld [vmem:[%s4] sm:$0x1]
    %v1218 = vlaneseq
    %v1219 = vshrl.u32 %v1218, 7
    %v1220 = vsub.s32 0, %v1219
    %v1221 = vrot.slane %v1216, %v1220
    %v1223 = vmul.f32 %v1213, %v1221
    %v1224 = vld [vmem:[%s5] sm:$0x1]
    %v1226 = vlaneseq
    %v1227 = vshrl.u32 %v1226, 7
    %v1228 = vsub.s32 0, %v1227
    %v1229 = vrot.slane %v1224, %v1228
    %v1231 = vadd.f32 %v1223, %v1229
    %vm1232 = vcmp.gt.f32.partialorder %v1231, 0.0
    %v1233 = vmul.f32 %v1231, 1.442695
    %v1234 = vpow.pop %v1233
    %v1235 = vsub.f32 %v1234, 1.0
    %v1236 = vsel %vm1232, %v1231, %v1235
    %v1237 = vld [vmem:[#allocation8] sm:$0xff]
    %v1238 = vld [vmem:[#allocation8 + $0x8] sm:$0xff]
    %v1239 = vld [vmem:[#allocation8 + $0x10] sm:$0xff]
    %v1240 = vld [vmem:[#allocation8 + $0x18] sm:$0xff]
    %v1241 = vld [vmem:[#allocation8 + $0x20] sm:$0xff]
    %v1242 = vld [vmem:[#allocation8 + $0x28] sm:$0xff]
    %v1243 = vld [vmem:[#allocation8 + $0x30] sm:$0xff]
    %v1244 = vld [vmem:[#allocation8 + $0x38] sm:$0xff]
    %v1245 = vld [vmem:[#allocation8 + $0x40] sm:$0xff]
    %v1246 = vld [vmem:[#allocation8 + $0x48] sm:$0xff]
    %v1247 = vld [vmem:[#allocation8 + $0x50] sm:$0xff]
    %v1248 = vld [vmem:[#allocation8 + $0x58] sm:$0xff]
    %v1249 = vld [vmem:[#allocation8 + $0x60] sm:$0xff]
    %v1250 = vld [vmem:[#allocation8 + $0x68] sm:$0xff]
    %v1251 = vld [vmem:[#allocation8 + $0x70] sm:$0xff]
    %v1252 = vld [vmem:[#allocation8 + $0x78] sm:$0xff]
    %1253 = vmatprep.subr.mxu0 0.0
    %v1254 = vand.u32 %v1237, 4294901760
    %1255 = vmatpush1.msra.mxu0 %v1254
    %1256 = vmatprep.subr.mxu0 0.0
    %v1257 = vand.u32 %v1238, 4294901760
    %1258 = vmatpush1.msra.mxu0 %v1257
    %1259 = vmatprep.subr.mxu0 0.0
    %v1260 = vand.u32 %v1239, 4294901760
    %1261 = vmatpush1.msra.mxu0 %v1260
    %1262 = vmatprep.subr.mxu0 0.0
    %v1263 = vand.u32 %v1240, 4294901760
    %1264 = vmatpush1.msra.mxu0 %v1263
    %1265 = vmatprep.subr.mxu0 0.0
    %v1266 = vand.u32 %v1241, 4294901760
    %1267 = vmatpush1.msra.mxu0 %v1266
    %1268 = vmatprep.subr.mxu0 0.0
    %v1269 = vand.u32 %v1242, 4294901760
    %1270 = vmatpush1.msra.mxu0 %v1269
    %1271 = vmatprep.subr.mxu0 0.0
    %v1272 = vand.u32 %v1243, 4294901760
    %1273 = vmatpush1.msra.mxu0 %v1272
    %1274 = vmatprep.subr.mxu0 0.0
    %v1275 = vand.u32 %v1244, 4294901760
    %1276 = vmatpush1.msra.mxu0 %v1275
    %1277 = vmatprep.subr.mxu0 0.0
    %v1278 = vand.u32 %v1245, 4294901760
    %1279 = vmatpush1.msra.mxu0 %v1278
    %1280 = vmatprep.subr.mxu0 0.0
    %v1281 = vand.u32 %v1246, 4294901760
    %1282 = vmatpush1.msra.mxu0 %v1281
    %1283 = vmatprep.subr.mxu0 0.0
    %v1284 = vand.u32 %v1247, 4294901760
    %1285 = vmatpush1.msra.mxu0 %v1284
    %1286 = vmatprep.subr.mxu0 0.0
    %v1287 = vand.u32 %v1248, 4294901760
    %1288 = vmatpush1.msra.mxu0 %v1287
    %1289 = vmatprep.subr.mxu0 0.0
    %v1290 = vand.u32 %v1249, 4294901760
    %1291 = vmatpush1.msra.mxu0 %v1290
    %1292 = vmatprep.subr.mxu0 0.0
    %v1293 = vand.u32 %v1250, 4294901760
    %1294 = vmatpush1.msra.mxu0 %v1293
    %1295 = vmatprep.subr.mxu0 0.0
    %v1296 = vand.u32 %v1251, 4294901760
    %1297 = vmatpush1.msra.mxu0 %v1296
    %1298 = vmatprep.subr.mxu0 0.0
    %v1299 = vand.u32 %v1252, 4294901760
    %1300 = vmatpush1.msra.mxu0 %v1299
    %1301 = vmatprep.subr.mxu0 0.0
    %1302 = vmatpush1.msra.mxu0 0.0
    %1303 = vmatprep.subr.mxu0 0.0
    %1304 = vmatpush1.msra.mxu0 0.0
    %1305 = vmatprep.subr.mxu0 0.0
    %1306 = vmatpush1.msra.mxu0 0.0
    %1307 = vmatprep.subr.mxu0 0.0
    %1308 = vmatpush1.msra.mxu0 0.0
    %1309 = vmatprep.subr.mxu0 0.0
    %1310 = vmatpush1.msra.mxu0 0.0
    %1311 = vmatprep.subr.mxu0 0.0
    %1312 = vmatpush1.msra.mxu0 0.0
    %1313 = vmatprep.subr.mxu0 0.0
    %1314 = vmatpush1.msra.mxu0 0.0
    %1315 = vmatprep.subr.mxu0 0.0
    %1316 = vmatpush1.msra.mxu0 0.0
    %1317 = vmatprep.subr.mxu0 0.0
    %1318 = vmatpush1.msra.mxu0 0.0
    %1319 = vmatprep.subr.mxu0 0.0
    %1320 = vmatpush1.msra.mxu0 0.0
    %1321 = vmatprep.subr.mxu0 0.0
    %1322 = vmatpush1.msra.mxu0 0.0
    %1323 = vmatprep.subr.mxu0 0.0
    %1324 = vmatpush1.msra.mxu0 0.0
    %1325 = vmatprep.subr.mxu0 0.0
    %1326 = vmatpush1.msra.mxu0 0.0
    %1327 = vmatprep.subr.mxu0 0.0
    %1328 = vmatpush1.msra.mxu0 0.0
    %1329 = vmatprep.subr.mxu0 0.0
    %1330 = vmatpush1.msra.mxu0 0.0
    %1331 = vmatprep.subr.mxu0 0.0
    %1332 = vmatpush1.msra.mxu0 0.0
    %1333 = vmatprep.mubr.f32.mxu0 0.0
    %v1334 = vand.u32 %v1236, 4294901760
    %v1335 = vsub.f32 %v1236, %v1334
    %v1336 = vand.u32 %v1335, 4294901760
    %v1337 = vsub.f32 %v1335, %v1336
    %v1338 = vand.u32 %v1337, 4294901760
    %1339 = vmatmul.mubr.f32.gmra.mrb[0].mxu0 %v1338
    %v1340 = vpop.f32.mrb[0].mxu0
    %v1341 = vadd.f32 0.0, %v1340
    %v1342 = vpop.f32.mrb[0].mxu0
    %1343 = vdwg.mxu0
    %1344 = vmatprep.subr.mxu0 0.0
    %v1345 = vand.u32 %v1237, 4294901760
    %v1346 = vsub.f32 %v1237, %v1345
    %v1347 = vand.u32 %v1346, 4294901760
    %v1348 = vsub.f32 %v1346, %v1347
    %v1349 = vand.u32 %v1348, 4294901760
    %1350 = vmatpush1.msra.mxu0 %v1349
    %1351 = vmatprep.subr.mxu0 0.0
    %v1352 = vand.u32 %v1238, 4294901760
    %v1353 = vsub.f32 %v1238, %v1352
    %v1354 = vand.u32 %v1353, 4294901760
    %v1355 = vsub.f32 %v1353, %v1354
    %v1356 = vand.u32 %v1355, 4294901760
    %1357 = vmatpush1.msra.mxu0 %v1356
    %1358 = vmatprep.subr.mxu0 0.0
    %v1359 = vand.u32 %v1239, 4294901760
    %v1360 = vsub.f32 %v1239, %v1359
    %v1361 = vand.u32 %v1360, 4294901760
    %v1362 = vsub.f32 %v1360, %v1361
    %v1363 = vand.u32 %v1362, 4294901760
    %1364 = vmatpush1.msra.mxu0 %v1363
    %1365 = vmatprep.subr.mxu0 0.0
    %v1366 = vand.u32 %v1240, 4294901760
    %v1367 = vsub.f32 %v1240, %v1366
    %v1368 = vand.u32 %v1367, 4294901760
    %v1369 = vsub.f32 %v1367, %v1368
    %v1370 = vand.u32 %v1369, 4294901760
    %1371 = vmatpush1.msra.mxu0 %v1370
    %1372 = vmatprep.subr.mxu0 0.0
    %v1373 = vand.u32 %v1241, 4294901760
    %v1374 = vsub.f32 %v1241, %v1373
    %v1375 = vand.u32 %v1374, 4294901760
    %v1376 = vsub.f32 %v1374, %v1375
    %v1377 = vand.u32 %v1376, 4294901760
    %1378 = vmatpush1.msra.mxu0 %v1377
    %1379 = vmatprep.subr.mxu0 0.0
    %v1380 = vand.u32 %v1242, 4294901760
    %v1381 = vsub.f32 %v1242, %v1380
    %v1382 = vand.u32 %v1381, 4294901760
    %v1383 = vsub.f32 %v1381, %v1382
    %v1384 = vand.u32 %v1383, 4294901760
    %1385 = vmatpush1.msra.mxu0 %v1384
    %1386 = vmatprep.subr.mxu0 0.0
    %v1387 = vand.u32 %v1243, 4294901760
    %v1388 = vsub.f32 %v1243, %v1387
    %v1389 = vand.u32 %v1388, 4294901760
    %v1390 = vsub.f32 %v1388, %v1389
    %v1391 = vand.u32 %v1390, 4294901760
    %1392 = vmatpush1.msra.mxu0 %v1391
    %1393 = vmatprep.subr.mxu0 0.0
    %v1394 = vand.u32 %v1244, 4294901760
    %v1395 = vsub.f32 %v1244, %v1394
    %v1396 = vand.u32 %v1395, 4294901760
    %v1397 = vsub.f32 %v1395, %v1396
    %v1398 = vand.u32 %v1397, 4294901760
    %1399 = vmatpush1.msra.mxu0 %v1398
    %1400 = vmatprep.subr.mxu0 0.0
    %v1401 = vand.u32 %v1245, 4294901760
    %v1402 = vsub.f32 %v1245, %v1401
    %v1403 = vand.u32 %v1402, 4294901760
    %v1404 = vsub.f32 %v1402, %v1403
    %v1405 = vand.u32 %v1404, 4294901760
    %1406 = vmatpush1.msra.mxu0 %v1405
    %1407 = vmatprep.subr.mxu0 0.0
    %v1408 = vand.u32 %v1246, 4294901760
    %v1409 = vsub.f32 %v1246, %v1408
    %v1410 = vand.u32 %v1409, 4294901760
    %v1411 = vsub.f32 %v1409, %v1410
    %v1412 = vand.u32 %v1411, 4294901760
    %1413 = vmatpush1.msra.mxu0 %v1412
    %1414 = vmatprep.subr.mxu0 0.0
    %v1415 = vand.u32 %v1247, 4294901760
    %v1416 = vsub.f32 %v1247, %v1415
    %v1417 = vand.u32 %v1416, 4294901760
    %v1418 = vsub.f32 %v1416, %v1417
    %v1419 = vand.u32 %v1418, 4294901760
    %1420 = vmatpush1.msra.mxu0 %v1419
    %1421 = vmatprep.subr.mxu0 0.0
    %v1422 = vand.u32 %v1248, 4294901760
    %v1423 = vsub.f32 %v1248, %v1422
    %v1424 = vand.u32 %v1423, 4294901760
    %v1425 = vsub.f32 %v1423, %v1424
    %v1426 = vand.u32 %v1425, 4294901760
    %1427 = vmatpush1.msra.mxu0 %v1426
    %1428 = vmatprep.subr.mxu0 0.0
    %v1429 = vand.u32 %v1249, 4294901760
    %v1430 = vsub.f32 %v1249, %v1429
    %v1431 = vand.u32 %v1430, 4294901760
    %v1432 = vsub.f32 %v1430, %v1431
    %v1433 = vand.u32 %v1432, 4294901760
    %1434 = vmatpush1.msra.mxu0 %v1433
    %1435 = vmatprep.subr.mxu0 0.0
    %v1436 = vand.u32 %v1250, 4294901760
    %v1437 = vsub.f32 %v1250, %v1436
    %v1438 = vand.u32 %v1437, 4294901760
    %v1439 = vsub.f32 %v1437, %v1438
    %v1440 = vand.u32 %v1439, 4294901760
    %1441 = vmatpush1.msra.mxu0 %v1440
    %1442 = vmatprep.subr.mxu0 0.0
    %v1443 = vand.u32 %v1251, 4294901760
    %v1444 = vsub.f32 %v1251, %v1443
    %v1445 = vand.u32 %v1444, 4294901760
    %v1446 = vsub.f32 %v1444, %v1445
    %v1447 = vand.u32 %v1446, 4294901760
    %1448 = vmatpush1.msra.mxu0 %v1447
    %1449 = vmatprep.subr.mxu0 0.0
    %v1450 = vand.u32 %v1252, 4294901760
    %v1451 = vsub.f32 %v1252, %v1450
    %v1452 = vand.u32 %v1451, 4294901760
    %v1453 = vsub.f32 %v1451, %v1452
    %v1454 = vand.u32 %v1453, 4294901760
    %1455 = vmatpush1.msra.mxu0 %v1454
    %1456 = vmatprep.subr.mxu0 0.0
    %1457 = vmatpush1.msra.mxu0 0.0
    %1458 = vmatprep.subr.mxu0 0.0
    %1459 = vmatpush1.msra.mxu0 0.0
    %1460 = vmatprep.subr.mxu0 0.0
    %1461 = vmatpush1.msra.mxu0 0.0
    %1462 = vmatprep.subr.mxu0 0.0
    %1463 = vmatpush1.msra.mxu0 0.0
    %1464 = vmatprep.subr.mxu0 0.0
    %1465 = vmatpush1.msra.mxu0 0.0
    %1466 = vmatprep.subr.mxu0 0.0
    %1467 = vmatpush1.msra.mxu0 0.0
    %1468 = vmatprep.subr.mxu0 0.0
    %1469 = vmatpush1.msra.mxu0 0.0
    %1470 = vmatprep.subr.mxu0 0.0
    %1471 = vmatpush1.msra.mxu0 0.0
    %1472 = vmatprep.subr.mxu0 0.0
    %1473 = vmatpush1.msra.mxu0 0.0
    %1474 = vmatprep.subr.mxu0 0.0
    %1475 = vmatpush1.msra.mxu0 0.0
    %1476 = vmatprep.subr.mxu0 0.0
    %1477 = vmatpush1.msra.mxu0 0.0
    %1478 = vmatprep.subr.mxu0 0.0
    %1479 = vmatpush1.msra.mxu0 0.0
    %1480 = vmatprep.subr.mxu0 0.0
    %1481 = vmatpush1.msra.mxu0 0.0
    %1482 = vmatprep.subr.mxu0 0.0
    %1483 = vmatpush1.msra.mxu0 0.0
    %1484 = vmatprep.subr.mxu0 0.0
    %1485 = vmatpush1.msra.mxu0 0.0
    %1486 = vmatprep.subr.mxu0 0.0
    %1487 = vmatpush1.msra.mxu0 0.0
    %1488 = vmatprep.mubr.f32.mxu0 0.0
    %v1489 = vand.u32 %v1236, 4294901760
    %1490 = vmatmul.mubr.f32.gmra.mrb[0].mxu0 %v1489
    %v1491 = vpop.f32.mrb[0].mxu0
    %v1492 = vadd.f32 %v1341, %v1491
    %v1493 = vpop.f32.mrb[0].mxu0
    %1494 = vdwg.mxu0
    %1495 = vmatprep.subr.mxu0 0.0
    %v1496 = vand.u32 %v1237, 4294901760
    %v1497 = vsub.f32 %v1237, %v1496
    %1498 = vmatpush1.msra.mxu0 %v1497
    %1499 = vmatprep.subr.mxu0 0.0
    %v1500 = vand.u32 %v1238, 4294901760
    %v1501 = vsub.f32 %v1238, %v1500
    %1502 = vmatpush1.msra.mxu0 %v1501
    %1503 = vmatprep.subr.mxu0 0.0
    %v1504 = vand.u32 %v1239, 4294901760
    %v1505 = vsub.f32 %v1239, %v1504
    %1506 = vmatpush1.msra.mxu0 %v1505
    %1507 = vmatprep.subr.mxu0 0.0
    %v1508 = vand.u32 %v1240, 4294901760
    %v1509 = vsub.f32 %v1240, %v1508
    %1510 = vmatpush1.msra.mxu0 %v1509
    %1511 = vmatprep.subr.mxu0 0.0
    %v1512 = vand.u32 %v1241, 4294901760
    %v1513 = vsub.f32 %v1241, %v1512
    %1514 = vmatpush1.msra.mxu0 %v1513
    %1515 = vmatprep.subr.mxu0 0.0
    %v1516 = vand.u32 %v1242, 4294901760
    %v1517 = vsub.f32 %v1242, %v1516
    %1518 = vmatpush1.msra.mxu0 %v1517
    %1519 = vmatprep.subr.mxu0 0.0
    %v1520 = vand.u32 %v1243, 4294901760
    %v1521 = vsub.f32 %v1243, %v1520
    %1522 = vmatpush1.msra.mxu0 %v1521
    %1523 = vmatprep.subr.mxu0 0.0
    %v1524 = vand.u32 %v1244, 4294901760
    %v1525 = vsub.f32 %v1244, %v1524
    %1526 = vmatpush1.msra.mxu0 %v1525
    %1527 = vmatprep.subr.mxu0 0.0
    %v1528 = vand.u32 %v1245, 4294901760
    %v1529 = vsub.f32 %v1245, %v1528
    %1530 = vmatpush1.msra.mxu0 %v1529
    %1531 = vmatprep.subr.mxu0 0.0
    %v1532 = vand.u32 %v1246, 4294901760
    %v1533 = vsub.f32 %v1246, %v1532
    %1534 = vmatpush1.msra.mxu0 %v1533
    %1535 = vmatprep.subr.mxu0 0.0
    %v1536 = vand.u32 %v1247, 4294901760
    %v1537 = vsub.f32 %v1247, %v1536
    %1538 = vmatpush1.msra.mxu0 %v1537
    %1539 = vmatprep.subr.mxu0 0.0
    %v1540 = vand.u32 %v1248, 4294901760
    %v1541 = vsub.f32 %v1248, %v1540
    %1542 = vmatpush1.msra.mxu0 %v1541
    %1543 = vmatprep.subr.mxu0 0.0
    %v1544 = vand.u32 %v1249, 4294901760
    %v1545 = vsub.f32 %v1249, %v1544
    %1546 = vmatpush1.msra.mxu0 %v1545
    %1547 = vmatprep.subr.mxu0 0.0
    %v1548 = vand.u32 %v1250, 4294901760
    %v1549 = vsub.f32 %v1250, %v1548
    %1550 = vmatpush1.msra.mxu0 %v1549
    %1551 = vmatprep.subr.mxu0 0.0
    %v1552 = vand.u32 %v1251, 4294901760
    %v1553 = vsub.f32 %v1251, %v1552
    %1554 = vmatpush1.msra.mxu0 %v1553
    %1555 = vmatprep.subr.mxu0 0.0
    %v1556 = vand.u32 %v1252, 4294901760
    %v1557 = vsub.f32 %v1252, %v1556
    %1558 = vmatpush1.msra.mxu0 %v1557
    %1559 = vmatprep.subr.mxu0 0.0
    %1560 = vmatpush1.msra.mxu0 0.0
    %1561 = vmatprep.subr.mxu0 0.0
    %1562 = vmatpush1.msra.mxu0 0.0
    %1563 = vmatprep.subr.mxu0 0.0
    %1564 = vmatpush1.msra.mxu0 0.0
    %1565 = vmatprep.subr.mxu0 0.0
    %1566 = vmatpush1.msra.mxu0 0.0
    %1567 = vmatprep.subr.mxu0 0.0
    %1568 = vmatpush1.msra.mxu0 0.0
    %1569 = vmatprep.subr.mxu0 0.0
    %1570 = vmatpush1.msra.mxu0 0.0
    %1571 = vmatprep.subr.mxu0 0.0
    %1572 = vmatpush1.msra.mxu0 0.0
    %1573 = vmatprep.subr.mxu0 0.0
    %1574 = vmatpush1.msra.mxu0 0.0
    %1575 = vmatprep.subr.mxu0 0.0
    %1576 = vmatpush1.msra.mxu0 0.0
    %1577 = vmatprep.subr.mxu0 0.0
    %1578 = vmatpush1.msra.mxu0 0.0
    %1579 = vmatprep.subr.mxu0 0.0
    %1580 = vmatpush1.msra.mxu0 0.0
    %1581 = vmatprep.subr.mxu0 0.0
    %1582 = vmatpush1.msra.mxu0 0.0
    %1583 = vmatprep.subr.mxu0 0.0
    %1584 = vmatpush1.msra.mxu0 0.0
    %1585 = vmatprep.subr.mxu0 0.0
    %1586 = vmatpush1.msra.mxu0 0.0
    %1587 = vmatprep.subr.mxu0 0.0
    %1588 = vmatpush1.msra.mxu0 0.0
    %1589 = vmatprep.subr.mxu0 0.0
    %1590 = vmatpush1.msra.mxu0 0.0
    %1591 = vmatprep.mubr.f32.mxu0 0.0
    %v1592 = vand.u32 %v1236, 4294901760
    %v1593 = vsub.f32 %v1236, %v1592
    %1594 = vmatmul.mubr.f32.gmra.mrb[0].mxu0 %v1593
    %v1595 = vpop.f32.mrb[0].mxu0
    %v1596 = vadd.f32 %v1492, %v1595
    %v1597 = vpop.f32.mrb[0].mxu0
    %1598 = vdwg.mxu0
    %1599 = vmatprep.subr.mxu0 0.0
    %v1600 = vand.u32 %v1237, 4294901760
    %1601 = vmatpush1.msra.mxu0 %v1600
    %1602 = vmatprep.subr.mxu0 0.0
    %v1603 = vand.u32 %v1238, 4294901760
    %1604 = vmatpush1.msra.mxu0 %v1603
    %1605 = vmatprep.subr.mxu0 0.0
    %v1606 = vand.u32 %v1239, 4294901760
    %1607 = vmatpush1.msra.mxu0 %v1606
    %1608 = vmatprep.subr.mxu0 0.0
    %v1609 = vand.u32 %v1240, 4294901760
    %1610 = vmatpush1.msra.mxu0 %v1609
    %1611 = vmatprep.subr.mxu0 0.0
    %v1612 = vand.u32 %v1241, 4294901760
    %1613 = vmatpush1.msra.mxu0 %v1612
    %1614 = vmatprep.subr.mxu0 0.0
    %v1615 = vand.u32 %v1242, 4294901760
    %1616 = vmatpush1.msra.mxu0 %v1615
    %1617 = vmatprep.subr.mxu0 0.0
    %v1618 = vand.u32 %v1243, 4294901760
    %1619 = vmatpush1.msra.mxu0 %v1618
    %1620 = vmatprep.subr.mxu0 0.0
    %v1621 = vand.u32 %v1244, 4294901760
    %1622 = vmatpush1.msra.mxu0 %v1621
    %1623 = vmatprep.subr.mxu0 0.0
    %v1624 = vand.u32 %v1245, 4294901760
    %1625 = vmatpush1.msra.mxu0 %v1624
    %1626 = vmatprep.subr.mxu0 0.0
    %v1627 = vand.u32 %v1246, 4294901760
    %1628 = vmatpush1.msra.mxu0 %v1627
    %1629 = vmatprep.subr.mxu0 0.0
    %v1630 = vand.u32 %v1247, 4294901760
    %1631 = vmatpush1.msra.mxu0 %v1630
    %1632 = vmatprep.subr.mxu0 0.0
    %v1633 = vand.u32 %v1248, 4294901760
    %1634 = vmatpush1.msra.mxu0 %v1633
    %1635 = vmatprep.subr.mxu0 0.0
    %v1636 = vand.u32 %v1249, 4294901760
    %1637 = vmatpush1.msra.mxu0 %v1636
    %1638 = vmatprep.subr.mxu0 0.0
    %v1639 = vand.u32 %v1250, 4294901760
    %1640 = vmatpush1.msra.mxu0 %v1639
    %1641 = vmatprep.subr.mxu0 0.0
    %v1642 = vand.u32 %v1251, 4294901760
    %1643 = vmatpush1.msra.mxu0 %v1642
    %1644 = vmatprep.subr.mxu0 0.0
    %v1645 = vand.u32 %v1252, 4294901760
    %1646 = vmatpush1.msra.mxu0 %v1645
    %1647 = vmatprep.subr.mxu0 0.0
    %1648 = vmatpush1.msra.mxu0 0.0
    %1649 = vmatprep.subr.mxu0 0.0
    %1650 = vmatpush1.msra.mxu0 0.0
    %1651 = vmatprep.subr.mxu0 0.0
    %1652 = vmatpush1.msra.mxu0 0.0
    %1653 = vmatprep.subr.mxu0 0.0
    %1654 = vmatpush1.msra.mxu0 0.0
    %1655 = vmatprep.subr.mxu0 0.0
    %1656 = vmatpush1.msra.mxu0 0.0
    %1657 = vmatprep.subr.mxu0 0.0
    %1658 = vmatpush1.msra.mxu0 0.0
    %1659 = vmatprep.subr.mxu0 0.0
    %1660 = vmatpush1.msra.mxu0 0.0
    %1661 = vmatprep.subr.mxu0 0.0
    %1662 = vmatpush1.msra.mxu0 0.0
    %1663 = vmatprep.subr.mxu0 0.0
    %1664 = vmatpush1.msra.mxu0 0.0
    %1665 = vmatprep.subr.mxu0 0.0
    %1666 = vmatpush1.msra.mxu0 0.0
    %1667 = vmatprep.subr.mxu0 0.0
    %1668 = vmatpush1.msra.mxu0 0.0
    %1669 = vmatprep.subr.mxu0 0.0
    %1670 = vmatpush1.msra.mxu0 0.0
    %1671 = vmatprep.subr.mxu0 0.0
    %1672 = vmatpush1.msra.mxu0 0.0
    %1673 = vmatprep.subr.mxu0 0.0
    %1674 = vmatpush1.msra.mxu0 0.0
    %1675 = vmatprep.subr.mxu0 0.0
    %1676 = vmatpush1.msra.mxu0 0.0
    %1677 = vmatprep.subr.mxu0 0.0
    %1678 = vmatpush1.msra.mxu0 0.0
    %1679 = vmatprep.mubr.f32.mxu0 0.0
    %v1680 = vand.u32 %v1236, 4294901760
    %v1681 = vsub.f32 %v1236, %v1680
    %v1682 = vand.u32 %v1681, 4294901760
    %1683 = vmatmul.mubr.f32.gmra.mrb[0].mxu0 %v1682
    %v1684 = vpop.f32.mrb[0].mxu0
    %v1685 = vadd.f32 %v1596, %v1684
    %v1686 = vpop.f32.mrb[0].mxu0
    %1687 = vdwg.mxu0
    %1688 = vmatprep.subr.mxu0 0.0
    %v1689 = vand.u32 %v1237, 4294901760
    %v1690 = vsub.f32 %v1237, %v1689
    %v1691 = vand.u32 %v1690, 4294901760
    %1692 = vmatpush1.msra.mxu0 %v1691
    %1693 = vmatprep.subr.mxu0 0.0
    %v1694 = vand.u32 %v1238, 4294901760
    %v1695 = vsub.f32 %v1238, %v1694
    %v1696 = vand.u32 %v1695, 4294901760
    %1697 = vmatpush1.msra.mxu0 %v1696
    %1698 = vmatprep.subr.mxu0 0.0
    %v1699 = vand.u32 %v1239, 4294901760
    %v1700 = vsub.f32 %v1239, %v1699
    %v1701 = vand.u32 %v1700, 4294901760
    %1702 = vmatpush1.msra.mxu0 %v1701
    %1703 = vmatprep.subr.mxu0 0.0
    %v1704 = vand.u32 %v1240, 4294901760
    %v1705 = vsub.f32 %v1240, %v1704
    %v1706 = vand.u32 %v1705, 4294901760
    %1707 = vmatpush1.msra.mxu0 %v1706
    %1708 = vmatprep.subr.mxu0 0.0
    %v1709 = vand.u32 %v1241, 4294901760
    %v1710 = vsub.f32 %v1241, %v1709
    %v1711 = vand.u32 %v1710, 4294901760
    %1712 = vmatpush1.msra.mxu0 %v1711
    %1713 = vmatprep.subr.mxu0 0.0
    %v1714 = vand.u32 %v1242, 4294901760
    %v1715 = vsub.f32 %v1242, %v1714
    %v1716 = vand.u32 %v1715, 4294901760
    %1717 = vmatpush1.msra.mxu0 %v1716
    %1718 = vmatprep.subr.mxu0 0.0
    %v1719 = vand.u32 %v1243, 4294901760
    %v1720 = vsub.f32 %v1243, %v1719
    %v1721 = vand.u32 %v1720, 4294901760
    %1722 = vmatpush1.msra.mxu0 %v1721
    %1723 = vmatprep.subr.mxu0 0.0
    %v1724 = vand.u32 %v1244, 4294901760
    %v1725 = vsub.f32 %v1244, %v1724
    %v1726 = vand.u32 %v1725, 4294901760
    %1727 = vmatpush1.msra.mxu0 %v1726
    %1728 = vmatprep.subr.mxu0 0.0
    %v1729 = vand.u32 %v1245, 4294901760
    %v1730 = vsub.f32 %v1245, %v1729
    %v1731 = vand.u32 %v1730, 4294901760
    %1732 = vmatpush1.msra.mxu0 %v1731
    %1733 = vmatprep.subr.mxu0 0.0
    %v1734 = vand.u32 %v1246, 4294901760
    %v1735 = vsub.f32 %v1246, %v1734
    %v1736 = vand.u32 %v1735, 4294901760
    %1737 = vmatpush1.msra.mxu0 %v1736
    %1738 = vmatprep.subr.mxu0 0.0
    %v1739 = vand.u32 %v1247, 4294901760
    %v1740 = vsub.f32 %v1247, %v1739
    %v1741 = vand.u32 %v1740, 4294901760
    %1742 = vmatpush1.msra.mxu0 %v1741
    %1743 = vmatprep.subr.mxu0 0.0
    %v1744 = vand.u32 %v1248, 4294901760
    %v1745 = vsub.f32 %v1248, %v1744
    %v1746 = vand.u32 %v1745, 4294901760
    %1747 = vmatpush1.msra.mxu0 %v1746
    %1748 = vmatprep.subr.mxu0 0.0
    %v1749 = vand.u32 %v1249, 4294901760
    %v1750 = vsub.f32 %v1249, %v1749
    %v1751 = vand.u32 %v1750, 4294901760
    %1752 = vmatpush1.msra.mxu0 %v1751
    %1753 = vmatprep.subr.mxu0 0.0
    %v1754 = vand.u32 %v1250, 4294901760
    %v1755 = vsub.f32 %v1250, %v1754
    %v1756 = vand.u32 %v1755, 4294901760
    %1757 = vmatpush1.msra.mxu0 %v1756
    %1758 = vmatprep.subr.mxu0 0.0
    %v1759 = vand.u32 %v1251, 4294901760
    %v1760 = vsub.f32 %v1251, %v1759
    %v1761 = vand.u32 %v1760, 4294901760
    %1762 = vmatpush1.msra.mxu0 %v1761
    %1763 = vmatprep.subr.mxu0 0.0
    %v1764 = vand.u32 %v1252, 4294901760
    %v1765 = vsub.f32 %v1252, %v1764
    %v1766 = vand.u32 %v1765, 4294901760
    %1767 = vmatpush1.msra.mxu0 %v1766
    %1768 = vmatprep.subr.mxu0 0.0
    %1769 = vmatpush1.msra.mxu0 0.0
    %1770 = vmatprep.subr.mxu0 0.0
    %1771 = vmatpush1.msra.mxu0 0.0
    %1772 = vmatprep.subr.mxu0 0.0
    %1773 = vmatpush1.msra.mxu0 0.0
    %1774 = vmatprep.subr.mxu0 0.0
    %1775 = vmatpush1.msra.mxu0 0.0
    %1776 = vmatprep.subr.mxu0 0.0
    %1777 = vmatpush1.msra.mxu0 0.0
    %1778 = vmatprep.subr.mxu0 0.0
    %1779 = vmatpush1.msra.mxu0 0.0
    %1780 = vmatprep.subr.mxu0 0.0
    %1781 = vmatpush1.msra.mxu0 0.0
    %1782 = vmatprep.subr.mxu0 0.0
    %1783 = vmatpush1.msra.mxu0 0.0
    %1784 = vmatprep.subr.mxu0 0.0
    %1785 = vmatpush1.msra.mxu0 0.0
    %1786 = vmatprep.subr.mxu0 0.0
    %1787 = vmatpush1.msra.mxu0 0.0
    %1788 = vmatprep.subr.mxu0 0.0
    %1789 = vmatpush1.msra.mxu0 0.0
    %1790 = vmatprep.subr.mxu0 0.0
    %1791 = vmatpush1.msra.mxu0 0.0
    %1792 = vmatprep.subr.mxu0 0.0
    %1793 = vmatpush1.msra.mxu0 0.0
    %1794 = vmatprep.subr.mxu0 0.0
    %1795 = vmatpush1.msra.mxu0 0.0
    %1796 = vmatprep.subr.mxu0 0.0
    %1797 = vmatpush1.msra.mxu0 0.0
    %1798 = vmatprep.subr.mxu0 0.0
    %1799 = vmatpush1.msra.mxu0 0.0
    %1800 = vmatprep.mubr.f32.mxu0 0.0
    %v1801 = vand.u32 %v1236, 4294901760
    %1802 = vmatmul.mubr.f32.gmra.mrb[0].mxu0 %v1801
    %v1803 = vpop.f32.mrb[0].mxu0
    %v1804 = vadd.f32 %v1685, %v1803
    %v1805 = vpop.f32.mrb[0].mxu0
    %1806 = vdwg.mxu0
    %1807 = vmatprep.subr.mxu0 0.0
    %v1808 = vand.u32 %v1237, 4294901760
    %1809 = vmatpush1.msra.mxu0 %v1808
    %1810 = vmatprep.subr.mxu0 0.0
    %v1811 = vand.u32 %v1238, 4294901760
    %1812 = vmatpush1.msra.mxu0 %v1811
    %1813 = vmatprep.subr.mxu0 0.0
    %v1814 = vand.u32 %v1239, 4294901760
    %1815 = vmatpush1.msra.mxu0 %v1814
    %1816 = vmatprep.subr.mxu0 0.0
    %v1817 = vand.u32 %v1240, 4294901760
    %1818 = vmatpush1.msra.mxu0 %v1817
    %1819 = vmatprep.subr.mxu0 0.0
    %v1820 = vand.u32 %v1241, 4294901760
    %1821 = vmatpush1.msra.mxu0 %v1820
    %1822 = vmatprep.subr.mxu0 0.0
    %v1823 = vand.u32 %v1242, 4294901760
    %1824 = vmatpush1.msra.mxu0 %v1823
    %1825 = vmatprep.subr.mxu0 0.0
    %v1826 = vand.u32 %v1243, 4294901760
    %1827 = vmatpush1.msra.mxu0 %v1826
    %1828 = vmatprep.subr.mxu0 0.0
    %v1829 = vand.u32 %v1244, 4294901760
    %1830 = vmatpush1.msra.mxu0 %v1829
    %1831 = vmatprep.subr.mxu0 0.0
    %v1832 = vand.u32 %v1245, 4294901760
    %1833 = vmatpush1.msra.mxu0 %v1832
    %1834 = vmatprep.subr.mxu0 0.0
    %v1835 = vand.u32 %v1246, 4294901760
    %1836 = vmatpush1.msra.mxu0 %v1835
    %1837 = vmatprep.subr.mxu0 0.0
    %v1838 = vand.u32 %v1247, 4294901760
    %1839 = vmatpush1.msra.mxu0 %v1838
    %1840 = vmatprep.subr.mxu0 0.0
    %v1841 = vand.u32 %v1248, 4294901760
    %1842 = vmatpush1.msra.mxu0 %v1841
    %1843 = vmatprep.subr.mxu0 0.0
    %v1844 = vand.u32 %v1249, 4294901760
    %1845 = vmatpush1.msra.mxu0 %v1844
    %1846 = vmatprep.subr.mxu0 0.0
    %v1847 = vand.u32 %v1250, 4294901760
    %1848 = vmatpush1.msra.mxu0 %v1847
    %1849 = vmatprep.subr.mxu0 0.0
    %v1850 = vand.u32 %v1251, 4294901760
    %1851 = vmatpush1.msra.mxu0 %v1850
    %1852 = vmatprep.subr.mxu0 0.0
    %v1853 = vand.u32 %v1252, 4294901760
    %1854 = vmatpush1.msra.mxu0 %v1853
    %1855 = vmatprep.subr.mxu0 0.0
    %1856 = vmatpush1.msra.mxu0 0.0
    %1857 = vmatprep.subr.mxu0 0.0
    %1858 = vmatpush1.msra.mxu0 0.0
    %1859 = vmatprep.subr.mxu0 0.0
    %1860 = vmatpush1.msra.mxu0 0.0
    %1861 = vmatprep.subr.mxu0 0.0
    %1862 = vmatpush1.msra.mxu0 0.0
    %1863 = vmatprep.subr.mxu0 0.0
    %1864 = vmatpush1.msra.mxu0 0.0
    %1865 = vmatprep.subr.mxu0 0.0
    %1866 = vmatpush1.msra.mxu0 0.0
    %1867 = vmatprep.subr.mxu0 0.0
    %1868 = vmatpush1.msra.mxu0 0.0
    %1869 = vmatprep.subr.mxu0 0.0
    %1870 = vmatpush1.msra.mxu0 0.0
    %1871 = vmatprep.subr.mxu0 0.0
    %1872 = vmatpush1.msra.mxu0 0.0
    %1873 = vmatprep.subr.mxu0 0.0
    %1874 = vmatpush1.msra.mxu0 0.0
    %1875 = vmatprep.subr.mxu0 0.0
    %1876 = vmatpush1.msra.mxu0 0.0
    %1877 = vmatprep.subr.mxu0 0.0
    %1878 = vmatpush1.msra.mxu0 0.0
    %1879 = vmatprep.subr.mxu0 0.0
    %1880 = vmatpush1.msra.mxu0 0.0
    %1881 = vmatprep.subr.mxu0 0.0
    %1882 = vmatpush1.msra.mxu0 0.0
    %1883 = vmatprep.subr.mxu0 0.0
    %1884 = vmatpush1.msra.mxu0 0.0
    %1885 = vmatprep.subr.mxu0 0.0
    %1886 = vmatpush1.msra.mxu0 0.0
    %1887 = vmatprep.mubr.f32.mxu0 0.0
    %v1888 = vand.u32 %v1236, 4294901760
    %1889 = vmatmul.mubr.f32.gmra.mrb[0].mxu0 %v1888
    %v1890 = vpop.f32.mrb[0].mxu0
    %v1891 = vadd.f32 %v1804, %v1890
    %v1892 = vpop.f32.mrb[0].mxu0
    %1893 = vdwg.mxu0
    %v1894 = vld [vmem:[%s7] sm:$0x1]
    %v1896 = vlaneseq
    %v1897 = vshrl.u32 %v1896, 7
    %v1898 = vsub.s32 0, %v1897
    %v1899 = vrot.slane %v1894, %v1898
    %v1901 = vmul.f32 %v1891, %v1899
    %v1902 = vld [vmem:[%s8] sm:$0x1]
    %v1904 = vlaneseq
    %v1905 = vshrl.u32 %v1904, 7
    %v1906 = vsub.s32 0, %v1905
    %v1907 = vrot.slane %v1902, %v1906
    %v1909 = vadd.f32 %v1901, %v1907
    %vm1910 = vcmp.gt.f32.partialorder %v1909, 0.0
    %v1911 = vmul.f32 %v1909, 1.442695
    %v1912 = vpow.pop %v1911
    %v1913 = vsub.f32 %v1912, 1.0
    %v1914 = vsel %vm1910, %v1909, %v1913
    %v1915 = vadd.f32 %v1914, %v556
    %v1916 = vadd.f32 %v1915, 1e-06
    %v1917 = vand.u32 2147483647, %v1916
    %1918 = vadd.xlane.f32.xlu0 %v1917
    %v1919 = vpop.xlane.xlu0 %1918
    %v1920 = vadd.f32 %v1919, 1e-06
    %v1921 = vrcp.pop %v1920
    %v1922 = vmul.f32 %v1916, %v1921
    %1923 = vst [vmem:[#allocation10] sm:$0xff] %v1922
    // Predicated region
    $region54: #{tpu_custom_call.1} parent=1 // pred_check
      _
    $region55: #{tpu_custom_call.1} parent=1 // pred_check_branch
      %1925 = sbr.rel (0) target = $region57
    $region56: #{tpu_custom_call.1} parent=1 // pred_region
      %s1927 = ssub.s32 128, 128
      %1928 = vsyncadd [#allocation4], %s1927
      %s1930 = sshll.u32 [#allocation10], 4
      %s1931 = int_to_ptr.vmem [resolvable:$true] %s1930
      %1933 = dma.vmem_to_hbm [thread:$0]  %s1931, 128, %s9, [#allocation4]
    $region57: #{tpu_custom_call.1} parent=1 // pred_fallthru
      _
    // Predicated region
    $region58: #{tpu_custom_call.1} parent=1 // pred_check
      _
    $region59: #{tpu_custom_call.1} parent=1 // pred_check_branch
      %1935 = sbr.rel (0) target = $region61
    $region60: #{tpu_custom_call.1} parent=1 // pred_region
      %1936 = dma.done [#allocation4], 128
    $region61: #{tpu_custom_call.1} parent=1 // pred_fallthru
      _
    %1937 = vsyncpa [#allocation3], 1
    %1938 = vsyncpa [#allocation6], 1
    %1939 = vsyncpa [#allocation9], 1
    %1940 = vsyncpa [#allocation4], 1

</llo_original>
